<compile_context>
chip_gen: v5e
topology: v5e:2x2
jax: 0.10.0
libtpu: 0.0.40
codegen_flags: <defaults>
</compile_context>

<pallas_src>
import functools

import jax
import jax.numpy as jnp
from jax.experimental import pallas as pl
from jax.experimental.pallas import tpu as pltpu


NUM_CLASSES = 80
CHANNEL = 64
COUT_PAD = 128   # lane-dense padded output width (>= 80 + 2 + 2)


# --------------------------------------------------------------------------
# Kernel: one fused (im2col-matmul -> BN -> ReLU -> block-diag 1x1 -> sigmoid)
# --------------------------------------------------------------------------
def _fused_head_kernel(xs_ref, w3_ref, scale_ref, shift_ref, w1_ref, b1_ref,
                       o_ref, *, num_sigmoid):
    """One row-block of the flattened batch per grid step; all heads fused.

    xs_ref:    (tm, 9*Cin)    im2col rows (dy,dx,c)-major along K.
    w3_ref:    (9*Cin, Cmid)  fused 3x3 conv weights of all three heads.
    scale/shift: (1, Cmid)    folded inference BatchNorm.
    w1_ref:    (Cmid, 128)    block-diagonal 1x1 weights (lane-padded).
    b1_ref:    (1, 128)       1x1 biases (lane-padded).
    o_ref:     (tm, 128)      lane-dense fused output.
    """
    # Single K=576 MXU dot for the 3x3 conv (all heads at once), f32 acc.
    acc = jnp.dot(xs_ref[...], w3_ref[...], preferred_element_type=jnp.float32)

    # Fused BatchNorm (inference affine) + ReLU.
    h = jnp.maximum(acc * scale_ref[...] + shift_ref[...], 0.0)

    # Block-diagonal 1x1 conv (all three heads at once) + bias.
    out = jnp.dot(h, w1_ref[...], preferred_element_type=jnp.float32) + b1_ref[...]

    # Sigmoid only on the cls-head lanes (first `num_sigmoid` lanes).
    lane = jax.lax.broadcasted_iota(jnp.int32, out.shape, 1)
    o_ref[...] = jnp.where(lane < num_sigmoid,
                           jax.nn.sigmoid(out), out).astype(o_ref.dtype)


# --------------------------------------------------------------------------
# One-time parameter packing (hoisted out of the per-call forward).
# --------------------------------------------------------------------------
def prepare_params(params, eps=1e-5):
    """Pack the three heads' PyTorch-layout weights into fused kernel tensors.

    Expects per head (PyTorch layouts):
      w3: (Cmid, Cin, 3, 3) OIHW      gamma/beta/mean/var: (Cmid,)
      w1: (Cout, Cmid, 1, 1) OIHW     b1: (Cout,)
    Head order MUST be (cls, wh, reg): the sigmoid mask assumes cls-first.
    """
    heads = (params['cls'], params['wh'], params['reg'])
    couts = tuple(int(p['w1'].shape[0]) for p in heads)
    cmids = tuple(int(p['w3'].shape[0]) for p in heads)
    cin = int(heads[0]['w3'].shape[1])
    cmid_total = sum(cmids)
    assert sum(couts) <= COUT_PAD, (couts, COUT_PAD)

    # 3x3 weights: OIHW -> HWIO, concat heads along Cmid, reshape so rows are
    # (dy, dx, c)-major -> (9*Cin, Cmid_total). Must match wrapper im2col order.
    w3_hwio = jnp.concatenate(
        [jnp.transpose(p['w3'], (2, 3, 1, 0)) for p in heads], axis=-1)
    w3_k = w3_hwio.reshape(9 * cin, cmid_total).astype(jnp.float32)

    # Folded inference BatchNorm scale/shift, concatenated across heads.
    scales, shifts = [], []
    for p in heads:
        inv_std = 1.0 / jnp.sqrt(p['var'].astype(jnp.float32) + eps)
        s = p['gamma'].astype(jnp.float32) * inv_std
        scales.append(s)
        shifts.append(p['beta'].astype(jnp.float32) - p['mean'].astype(jnp.float32) * s)
    scale = jnp.concatenate(scales).reshape(1, cmid_total)
    shift = jnp.concatenate(shifts).reshape(1, cmid_total)

    # Block-diagonal 1x1 weights / biases, zero-padded to a 128-lane output.
    w1_blk = jnp.zeros((cmid_total, COUT_PAD), jnp.float32)
    b1_blk = jnp.zeros((COUT_PAD,), jnp.float32)
    r = c = 0
    for p, cm, co in zip(heads, cmids, couts):
        w1_2d = jnp.transpose(p['w1'][:, :, 0, 0]).astype(jnp.float32)  # (Cmid, Cout)
        w1_blk = w1_blk.at[r:r + cm, c:c + co].set(w1_2d)
        b1_blk = b1_blk.at[c:c + co].set(p['b1'].astype(jnp.float32))
        r += cm
        c += co

    packed = dict(w3=w3_k, scale=scale, shift=shift,
                  w1=w1_blk, b1=b1_blk.reshape(1, COUT_PAD))
    return packed, couts


# --------------------------------------------------------------------------
# Forward (jitted): pad + im2col (one fused XLA pass) -> one pallas_call ->
# one slice+transpose -> split.
# --------------------------------------------------------------------------
@functools.partial(jax.jit, static_argnames=("couts",))
def resnet50_head_forward(x_nchw, packed, couts=(NUM_CLASSES, 2, 2)):
    """Input NCHW (PyTorch convention); returns (hm, wh, offset) in NCHW."""
    x = jnp.transpose(x_nchw, (0, 2, 3, 1)).astype(jnp.float32)   # -> NHWC
    N, H, W, Cin = x.shape

    # Spatial zero-pad once, fold ALL 9 taps into K: (N, H, W, 9*Cin).
    # (transpose + pad + 9 static slices + concat fuse into one XLA pass.)
    xp = jnp.pad(x, ((0, 0), (1, 1), (1, 1), (0, 0)))
    xs9 = jnp.concatenate(
        [xp[:, dy:dy + H, dx:dx + W, :] for dy in range(3) for dx in range(3)],
        axis=-1)
    M = N * H * W
    xs9 = xs9.reshape(M, 9 * Cin)

    cmid_total = packed['w3'].shape[1]

    # Batch collapsed into M; fixed 2-wide row split so both v7x TensorCores
    # get work (on single-TC v5e/v6e the 2nd step costs only ~0.35us).
    n_blk = 2 if (M % 16 == 0 and M >= 16) else 1
    tm = M // n_blk

    kernel = functools.partial(_fused_head_kernel, num_sigmoid=couts[0])

    out = pl.pallas_call(
        kernel,
        out_shape=jax.ShapeDtypeStruct((M, COUT_PAD), jnp.float32),
        grid=(n_blk,),
        in_specs=[
            pl.BlockSpec((tm, 9 * Cin),          lambda i: (i, 0)),
            pl.BlockSpec((9 * Cin, cmid_total),  lambda i: (0, 0)),
            pl.BlockSpec((1, cmid_total),        lambda i: (0, 0)),
            pl.BlockSpec((1, cmid_total),        lambda i: (0, 0)),
            pl.BlockSpec((cmid_total, COUT_PAD), lambda i: (0, 0)),
            pl.BlockSpec((1, COUT_PAD),          lambda i: (0, 0)),
        ],
        out_specs=pl.BlockSpec((tm, COUT_PAD), lambda i: (i, 0)),
        compiler_params=pltpu.CompilerParams(
            dimension_semantics=("parallel",)),
    )(xs9, packed['w3'], packed['scale'], packed['shift'],
      packed['w1'], packed['b1'])

    # Un-pad with a single slice + ONE NCHW transpose, then split.
    c0, c1, c2 = couts
    ctot = c0 + c1 + c2
    out = out.reshape(N, H, W, COUT_PAD)[..., :ctot]
    out_nchw = jnp.transpose(out, (0, 3, 1, 2))
    hm = out_nchw[:, :c0]
    wh = out_nchw[:, c0:c0 + c1]
    off = out_nchw[:, c0 + c1:ctot]
    return hm, wh, off


# --------------------------------------------------------------------------
# Pure-JAX reference (per head) for correctness checking.
# --------------------------------------------------------------------------
def _ref_head(x_nhwc, w3_oihw, gamma, beta, mean, var, w1_oihw, b1,
              apply_sigmoid, eps=1e-5):
    w3 = jnp.transpose(w3_oihw, (2, 3, 1, 0))   # OIHW -> HWIO
    y = jax.lax.conv_general_dilated(
        x_nhwc, w3, window_strides=(1, 1), padding='SAME',
        dimension_numbers=('NHWC', 'HWIO', 'NHWC'))
    scale = gamma / jnp.sqrt(var + eps)
    y = y * scale + (beta - mean * scale)
    y = jnp.maximum(y, 0.0)
    y = jnp.einsum('nhwc,oc->nhwo', y, w1_oihw[:, :, 0, 0]) + b1
    return jax.nn.sigmoid(y) if apply_sigmoid else y


def _make_head_params(key, cin, cmid, cout):
    """PyTorch-layout parameters (conv weights in OIHW)."""
    k = jax.random.split(key, 7)
    return dict(
        w3=jax.random.normal(k[0], (cmid, cin, 3, 3), jnp.float32) * 0.05,
        gamma=jax.random.uniform(k[1], (cmid,), jnp.float32, 0.5, 1.5),
        beta=jax.random.normal(k[2], (cmid,), jnp.float32) * 0.1,
        mean=jax.random.normal(k[3], (cmid,), jnp.float32) * 0.1,
        var=jax.random.uniform(k[4], (cmid,), jnp.float32, 0.5, 1.5),
        w1=jax.random.normal(k[5], (cout, cmid, 1, 1), jnp.float32) * 0.05,
        b1=jax.random.normal(k[6], (cout,), jnp.float32) * 0.1,
    )


if __name__ == "__main__":
    # Module constraints: Cin = Cmid = 64 (fixed by Conv2d(64,...) + BatchNorm2d(64)).
    N, C, H, W = 2, 64, 16, 16

    root = jax.random.PRNGKey(0)
    kx, kc, kw, kr = jax.random.split(root, 4)
    x_nchw = jax.random.normal(kx, (N, C, H, W), jnp.float32)

    params = {
        'cls': _make_head_params(kc, C, CHANNEL, NUM_CLASSES),
        'wh':  _make_head_params(kw, C, CHANNEL, 2),
        'reg': _make_head_params(kr, C, CHANNEL, 2),
    }

    # One-time parameter packing (outside the per-call forward path).
    packed, couts = prepare_params(params)

    hm, wh, off = jax.block_until_ready(
        resnet50_head_forward(x_nchw, packed, couts=couts))

    # Correctness check against a pure-JAX per-head reference.
    # TODO(synk): BatchNorm training-mode running-stat updates are not modeled
    # (inference-folded BN only), matching eval()-mode semantics.
    x_nhwc = jnp.transpose(x_nchw, (0, 2, 3, 1))
    for out, p, sig in ((hm, params['cls'], True),
                        (wh, params['wh'], False),
                        (off, params['reg'], False)):
        ref = _ref_head(x_nhwc, p['w3'], p['gamma'], p['beta'], p['mean'],
                        p['var'], p['w1'], p['b1'], sig)
        ref = jnp.transpose(ref, (0, 3, 1, 2))
        assert out.shape == ref.shape, (out.shape, ref.shape)
        err = float(jnp.max(jnp.abs(out - ref)))
        assert jnp.allclose(out, ref, atol=1e-3, rtol=1e-3), f"max |err| = {err}"

    assert hm.shape == (N, NUM_CLASSES, H, W)
    assert wh.shape == (N, 2, H, W)
    assert off.shape == (N, 2, H, W)
    print("KERNEL_OK")
</pallas_src>

<mosaic_0001>
module attributes {stable_mosaic.version = 11 : i64} {
  func.func @_fused_head_kernel(%arg0: i32, %arg1: memref<256x576xf32, #tpu.memory_space<vmem>>, %arg2: memref<576x192xf32, #tpu.memory_space<vmem>>, %arg3: memref<1x192xf32, #tpu.memory_space<vmem>>, %arg4: memref<1x192xf32, #tpu.memory_space<vmem>>, %arg5: memref<192x128xf32, #tpu.memory_space<vmem>>, %arg6: memref<1x128xf32, #tpu.memory_space<vmem>>, %arg7: memref<256x128xf32, #tpu.memory_space<vmem>>) attributes {dimension_semantics = [#tpu.dimension_semantics<parallel>], iteration_bounds = array<i64: 2>, scalar_prefetch = 0 : i64, scratch_operands = 0 : i64, tpu.core_type = #tpu.core_type<tc>, window_params = [{transform_indices = @transform_0, window_bounds = array<i64: 256, 576>}, {pipeline_mode = #tpu.pipeline_mode<synchronous>, transform_indices = @transform_1, window_bounds = array<i64: 576, 192>}, {pipeline_mode = #tpu.pipeline_mode<synchronous>, transform_indices = @transform_2, window_bounds = array<i64: 1, 192>}, {pipeline_mode = #tpu.pipeline_mode<synchronous>, transform_indices = @transform_3, window_bounds = array<i64: 1, 192>}, {pipeline_mode = #tpu.pipeline_mode<synchronous>, transform_indices = @transform_4, window_bounds = array<i64: 192, 128>}, {pipeline_mode = #tpu.pipeline_mode<synchronous>, transform_indices = @transform_5, window_bounds = array<i64: 1, 128>}, {transform_indices = @transform_6, window_bounds = array<i64: 256, 128>}]} {
    %c0 = arith.constant 0 : index
    %c0_0 = arith.constant 0 : index
    %0 = vector.load %arg1[%c0, %c0_0] : memref<256x576xf32, #tpu.memory_space<vmem>>, vector<256x576xf32>
    %c0_1 = arith.constant 0 : index
    %c0_2 = arith.constant 0 : index
    %1 = vector.load %arg2[%c0_1, %c0_2] : memref<576x192xf32, #tpu.memory_space<vmem>>, vector<576x192xf32>
    %cst = arith.constant dense<0.000000e+00> : vector<256x192xf32>
    %2 = tpu.matmul %0, %1, %cst {dimension_numbers = #tpu.dot_dimension_numbers<[1], [0], [0], [1], [0, 0, 1, 1], [], []>} : vector<256x576xf32>, vector<576x192xf32>, vector<256x192xf32> -> vector<256x192xf32>
    %c0_3 = arith.constant 0 : index
    %c0_4 = arith.constant 0 : index
    %3 = vector.load %arg3[%c0_3, %c0_4] : memref<1x192xf32, #tpu.memory_space<vmem>>, vector<1x192xf32>
    %4 = vector.broadcast %3 : vector<1x192xf32> to vector<256x192xf32>
    %5 = arith.mulf %2, %4 : vector<256x192xf32>
    %c0_5 = arith.constant 0 : index
    %c0_6 = arith.constant 0 : index
    %6 = vector.load %arg4[%c0_5, %c0_6] : memref<1x192xf32, #tpu.memory_space<vmem>>, vector<1x192xf32>
    %7 = vector.broadcast %6 : vector<1x192xf32> to vector<256x192xf32>
    %8 = arith.addf %5, %7 : vector<256x192xf32>
    %cst_7 = arith.constant 0.000000e+00 : f32
    %9 = vector.broadcast %cst_7 : f32 to vector<256x192xf32>
    %10 = arith.maximumf %8, %9 : vector<256x192xf32>
    %c0_8 = arith.constant 0 : index
    %c0_9 = arith.constant 0 : index
    %11 = vector.load %arg5[%c0_8, %c0_9] : memref<192x128xf32, #tpu.memory_space<vmem>>, vector<192x128xf32>
    %cst_10 = arith.constant dense<0.000000e+00> : vector<256x128xf32>
    %12 = tpu.matmul %10, %11, %cst_10 {dimension_numbers = #tpu.dot_dimension_numbers<[1], [0], [0], [1], [0, 0, 1, 1], [], []>} : vector<256x192xf32>, vector<192x128xf32>, vector<256x128xf32> -> vector<256x128xf32>
    %c0_11 = arith.constant 0 : index
    %c0_12 = arith.constant 0 : index
    %13 = vector.load %arg6[%c0_11, %c0_12] : memref<1x128xf32, #tpu.memory_space<vmem>>, vector<1x128xf32>
    %14 = vector.broadcast %13 : vector<1x128xf32> to vector<256x128xf32>
    %15 = arith.addf %12, %14 : vector<256x128xf32>
    %16 = tpu.iota {dimensions = array<i32: 1>} : vector<256x128xi32>
    %c80_i32 = arith.constant 80 : i32
    %17 = vector.broadcast %c80_i32 : i32 to vector<256x128xi32>
    %18 = arith.cmpi slt, %16, %17 : vector<256x128xi32>
    %19 = arith.negf %15 : vector<256x128xf32>
    %20 = math.exp %19 : vector<256x128xf32>
    %cst_13 = arith.constant 1.000000e+00 : f32
    %21 = vector.broadcast %cst_13 : f32 to vector<256x128xf32>
    %22 = arith.addf %21, %20 : vector<256x128xf32>
    %23 = arith.divf %21, %22 : vector<256x128xf32>
    %24 = arith.select %18, %23, %15 : vector<256x128xi1>, vector<256x128xf32>
    %c0_14 = arith.constant 0 : index
    %c0_15 = arith.constant 0 : index
    %25 = vector.load %arg7[%c0_14, %c0_15] : memref<256x128xf32, #tpu.memory_space<vmem>>, vector<256x128xf32>
    tpu.vector_store %arg7[%c0_14, %c0_15], %24 {strides = array<i32>} : memref<256x128xf32, #tpu.memory_space<vmem>>, vector<256x128xf32>,
    return
  }
  func.func @transform_0(%arg0: i32) -> (i32, i32) {
    %c0_i32 = arith.constant 0 : i32
    %c0_i32_0 = arith.constant 0 : i32
    return %arg0, %c0_i32 : i32, i32
  }
  func.func @transform_1(%arg0: i32) -> (i32, i32) {
    %c0_i32 = arith.constant 0 : i32
    %c0_i32_0 = arith.constant 0 : i32
    %c0_i32_1 = arith.constant 0 : i32
    return %c0_i32, %c0_i32_0 : i32, i32
  }
  func.func @transform_2(%arg0: i32) -> (i32, i32) {
    %c0_i32 = arith.constant 0 : i32
    %c0_i32_0 = arith.constant 0 : i32
    %c0_i32_1 = arith.constant 0 : i32
    return %c0_i32, %c0_i32_0 : i32, i32
  }
  func.func @transform_3(%arg0: i32) -> (i32, i32) {
    %c0_i32 = arith.constant 0 : i32
    %c0_i32_0 = arith.constant 0 : i32
    %c0_i32_1 = arith.constant 0 : i32
    return %c0_i32, %c0_i32_0 : i32, i32
  }
  func.func @transform_4(%arg0: i32) -> (i32, i32) {
    %c0_i32 = arith.constant 0 : i32
    %c0_i32_0 = arith.constant 0 : i32
    %c0_i32_1 = arith.constant 0 : i32
    return %c0_i32, %c0_i32_0 : i32, i32
  }
  func.func @transform_5(%arg0: i32) -> (i32, i32) {
    %c0_i32 = arith.constant 0 : i32
    %c0_i32_0 = arith.constant 0 : i32
    %c0_i32_1 = arith.constant 0 : i32
    return %c0_i32, %c0_i32_0 : i32, i32
  }
  func.func @transform_6(%arg0: i32) -> (i32, i32) {
    %c0_i32 = arith.constant 0 : i32
    %c0_i32_0 = arith.constant 0 : i32
    return %arg0, %c0_i32 : i32, i32
  }
}

</mosaic_0001>

<llo_original>
// kernel: resnet50_head_forward.1
$region0: #{resnet50_head_forward.1}
  #allocation0 [shape = 'u32[]', space=smem, size = 0x4, offset = 0x4, fixed_abs, tag = 'smem constant byte address 0x4 - core index']
  #allocation1 [shape = 'u32[72,128]{1,0:T(1,128)}', space=vmem, size = 0x9000, scoped, tag = 'internal scratch']
  %s0 = inlined_call_operand.vmem [shape: f32[512,576], index: 0, kind: input, shape index: {}]
  %s1 = inlined_call_operand.vmem [shape: f32[576,192], index: 1, kind: input, shape index: {}]
  %s2 = inlined_call_operand.vmem [shape: f32[1,192], index: 2, kind: input, shape index: {}]
  %s3 = inlined_call_operand.vmem [shape: f32[1,192], index: 3, kind: input, shape index: {}]
  %s4 = inlined_call_operand.vmem [shape: f32[192,128], index: 4, kind: input, shape index: {}]
  %s5 = inlined_call_operand.vmem [shape: f32[1,128], index: 5, kind: input, shape index: {}]
  %s6 = inlined_call_operand.vmem [shape: f32[512,128], index: 6, kind: output, shape index: {}]
  %s7 = sld [smem:[#allocation0]]
  $region57: #{resnet50_head_forward.1} parent=0
    _
  %s9 = ssub.s32 1, %s7
  %s10 = scalar_select 0, %s9, %s7
  loop: start=0, step=1, limit=4
  $region2: #{resnet50_head_forward.1} parent=0 // loop_pre_header
    _
  $region3: #{resnet50_head_forward.1} parent=0 // loop_header
    %s12 = sphi 0, %s16
    %p13 = scmp.ge.s32.totalorder %s12, 4
    %s22 = sphi 0, %s24
    %s25 = sphi 0, %s22
    %s26 = sphi 0, %s25
    %s42 = sphi 0, %s26
    %s46 = sphi 0, %s46
    %s48 = sphi 0, %s46
    %s49 = sphi 0, %s48
    %s63 = sphi 0, %s49
    %s67 = sphi 0, %s67
    %s69 = sphi 0, %s67
    %s70 = sphi 0, %s69
    %s84 = sphi 0, %s70
    %s88 = sphi 0, %s88
    %s90 = sphi 0, %s88
    %s91 = sphi 0, %s90
    %s105 = sphi 0, %s91
    %s109 = sphi 0, %s109
    %s111 = sphi 0, %s109
    %s112 = sphi 0, %s111
    %s126 = sphi 0, %s112
    %s130 = sphi 0, %s130
    %s132 = sphi 0, %s130
    %s133 = sphi 0, %s132
    %s147 = sphi 0, %s133
    %s153 = sphi 0, %s155
    %s156 = sphi 0, %s153
    %s157 = sphi 0, %s156
    %s173 = sphi 0, %s157
  $region4: #{resnet50_head_forward.1} parent=0 // loop_header_branch
    %15 = sbr.rel (%p13) target = $region8
  $region5: #{resnet50_head_forward.1} parent=0 // loop_body
    %s17 = ssub.s32 %s12, 1
    %s18 = ssub.s32 %s12, 2
    %s19 = sadd.s32 %s12, 1
    %s20 = ssub.s32 %s12, %s19
    %p21 = scmp.eq.s32.totalorder %s20, 0
    %s23 = sadd.s32 %s22, 1
    %s24 = scalar_select %p21, %s22, %s23
    %p27 = pneg %p21
    %p28 = scmp.eq.s32.totalorder %s12, 1
    %p29 = por %p27, %p28
    %p30 = scmp.ne.s32.totalorder %s22, %s25
    %p31 = scmp.eq.s32.totalorder %s12, 0
    %p32 = por %p30, %p31
    %p33 = scmp.ne.s32.totalorder %s22, %s25
    %p34 = scmp.eq.s32.totalorder %s17, 1
    %p35 = por %p33, %p34
    %p36 = scmp.ne.s32.totalorder %s25, %s26
    %p37 = scmp.eq.s32.totalorder %s17, 0
    %p38 = por %p36, %p37
    %p39 = scmp.ne.s32.totalorder %s25, %s26
    %p40 = scmp.eq.s32.totalorder %s18, 1
    %p41 = por %p39, %p40
    %p43 = scmp.ne.s32.totalorder %s26, %s42
    %p44 = scmp.eq.s32.totalorder %s18, 0
    %p45 = por %p43, %p44
    %s47 = sadd.s32 %s46, 1
    %p50 = scmp.eq.s32.totalorder %s12, 1
    %p51 = scmp.ne.s32.totalorder %s46, %s48
    %p52 = scmp.eq.s32.totalorder %s12, 0
    %p53 = por %p51, %p52
    %p54 = scmp.ne.s32.totalorder %s46, %s48
    %p55 = scmp.eq.s32.totalorder %s17, 1
    %p56 = por %p54, %p55
    %p57 = scmp.ne.s32.totalorder %s48, %s49
    %p58 = scmp.eq.s32.totalorder %s17, 0
    %p59 = por %p57, %p58
    %p60 = scmp.ne.s32.totalorder %s48, %s49
    %p61 = scmp.eq.s32.totalorder %s18, 1
    %p62 = por %p60, %p61
    %p64 = scmp.ne.s32.totalorder %s49, %s63
    %p65 = scmp.eq.s32.totalorder %s18, 0
    %p66 = por %p64, %p65
    %s68 = sadd.s32 %s67, 1
    %p71 = scmp.eq.s32.totalorder %s12, 1
    %p72 = scmp.ne.s32.totalorder %s67, %s69
    %p73 = scmp.eq.s32.totalorder %s12, 0
    %p74 = por %p72, %p73
    %p75 = scmp.ne.s32.totalorder %s67, %s69
    %p76 = scmp.eq.s32.totalorder %s17, 1
    %p77 = por %p75, %p76
    %p78 = scmp.ne.s32.totalorder %s69, %s70
    %p79 = scmp.eq.s32.totalorder %s17, 0
    %p80 = por %p78, %p79
    %p81 = scmp.ne.s32.totalorder %s69, %s70
    %p82 = scmp.eq.s32.totalorder %s18, 1
    %p83 = por %p81, %p82
    %p85 = scmp.ne.s32.totalorder %s70, %s84
    %p86 = scmp.eq.s32.totalorder %s18, 0
    %p87 = por %p85, %p86
    %s89 = sadd.s32 %s88, 1
    %p92 = scmp.eq.s32.totalorder %s12, 1
    %p93 = scmp.ne.s32.totalorder %s88, %s90
    %p94 = scmp.eq.s32.totalorder %s12, 0
    %p95 = por %p93, %p94
    %p96 = scmp.ne.s32.totalorder %s88, %s90
    %p97 = scmp.eq.s32.totalorder %s17, 1
    %p98 = por %p96, %p97
    %p99 = scmp.ne.s32.totalorder %s90, %s91
    %p100 = scmp.eq.s32.totalorder %s17, 0
    %p101 = por %p99, %p100
    %p102 = scmp.ne.s32.totalorder %s90, %s91
    %p103 = scmp.eq.s32.totalorder %s18, 1
    %p104 = por %p102, %p103
    %p106 = scmp.ne.s32.totalorder %s91, %s105
    %p107 = scmp.eq.s32.totalorder %s18, 0
    %p108 = por %p106, %p107
    %s110 = sadd.s32 %s109, 1
    %p113 = scmp.eq.s32.totalorder %s12, 1
    %p114 = scmp.ne.s32.totalorder %s109, %s111
    %p115 = scmp.eq.s32.totalorder %s12, 0
    %p116 = por %p114, %p115
    %p117 = scmp.ne.s32.totalorder %s109, %s111
    %p118 = scmp.eq.s32.totalorder %s17, 1
    %p119 = por %p117, %p118
    %p120 = scmp.ne.s32.totalorder %s111, %s112
    %p121 = scmp.eq.s32.totalorder %s17, 0
    %p122 = por %p120, %p121
    %p123 = scmp.ne.s32.totalorder %s111, %s112
    %p124 = scmp.eq.s32.totalorder %s18, 1
    %p125 = por %p123, %p124
    %p127 = scmp.ne.s32.totalorder %s112, %s126
    %p128 = scmp.eq.s32.totalorder %s18, 0
    %p129 = por %p127, %p128
    %s131 = sadd.s32 %s130, 1
    %p134 = scmp.eq.s32.totalorder %s12, 1
    %p135 = scmp.ne.s32.totalorder %s130, %s132
    %p136 = scmp.eq.s32.totalorder %s12, 0
    %p137 = por %p135, %p136
    %p138 = scmp.ne.s32.totalorder %s130, %s132
    %p139 = scmp.eq.s32.totalorder %s17, 1
    %p140 = por %p138, %p139
    %p141 = scmp.ne.s32.totalorder %s132, %s133
    %p142 = scmp.eq.s32.totalorder %s17, 0
    %p143 = por %p141, %p142
    %p144 = scmp.ne.s32.totalorder %s132, %s133
    %p145 = scmp.eq.s32.totalorder %s18, 1
    %p146 = por %p144, %p145
    %p148 = scmp.ne.s32.totalorder %s133, %s147
    %p149 = scmp.eq.s32.totalorder %s18, 0
    %p150 = por %p148, %p149
    %s151 = ssub.s32 %s12, %s19
    %p152 = scmp.eq.s32.totalorder %s151, 0
    %s154 = sadd.s32 %s153, 1
    %s155 = scalar_select %p152, %s153, %s154
    %p158 = pneg %p152
    %p159 = scmp.eq.s32.totalorder %s12, 1
    %p160 = por %p158, %p159
    %p161 = scmp.ne.s32.totalorder %s153, %s156
    %p162 = scmp.eq.s32.totalorder %s12, 0
    %p163 = por %p161, %p162
    %p164 = scmp.ne.s32.totalorder %s153, %s156
    %p165 = scmp.eq.s32.totalorder %s17, 1
    %p166 = por %p164, %p165
    %p167 = scmp.ne.s32.totalorder %s156, %s157
    %p168 = scmp.eq.s32.totalorder %s17, 0
    %p169 = por %p167, %p168
    %p170 = scmp.ne.s32.totalorder %s156, %s157
    %p171 = scmp.eq.s32.totalorder %s18, 1
    %p172 = por %p170, %p171
    %p174 = scmp.ne.s32.totalorder %s157, %s173
    %p175 = scmp.eq.s32.totalorder %s18, 0
    %p176 = por %p174, %p175
    %p177 = scmp.le.s32.totalorder 1, %s12
    %p178 = scmp.lt.s32.totalorder %s12, 3
    %p179 = pnand %p177, %p178
    %p180 = pneg %p179
    // Predicated region
    $region9: #{resnet50_head_forward.1} parent=5 // pred_check
      _
    $region10: #{resnet50_head_forward.1} parent=5 // pred_check_branch
      %182 = sbr.rel (%p179) target = $region12
    $region11: #{resnet50_head_forward.1} parent=5 // pred_region
      %s183 = ssub.s32 %s12, 1
      // Predicated region
      $region13: #{resnet50_head_forward.1} parent=11 // pred_check
        %p184 = pneg %p59
      $region14: #{resnet50_head_forward.1} parent=11 // pred_check_branch
        %186 = sbr.rel (%p184) target = $region16
      $region15: #{resnet50_head_forward.1} parent=11 // pred_region
        _
      $region16: #{resnet50_head_forward.1} parent=11 // pred_fallthru
        _
      // Predicated region
      $region17: #{resnet50_head_forward.1} parent=11 // pred_check
        %p187 = pneg %p80
      $region18: #{resnet50_head_forward.1} parent=11 // pred_check_branch
        %189 = sbr.rel (%p187) target = $region20
      $region19: #{resnet50_head_forward.1} parent=11 // pred_region
        _
      $region20: #{resnet50_head_forward.1} parent=11 // pred_fallthru
        _
      // Predicated region
      $region21: #{resnet50_head_forward.1} parent=11 // pred_check
        %p190 = pneg %p101
      $region22: #{resnet50_head_forward.1} parent=11 // pred_check_branch
        %192 = sbr.rel (%p190) target = $region24
      $region23: #{resnet50_head_forward.1} parent=11 // pred_region
        _
      $region24: #{resnet50_head_forward.1} parent=11 // pred_fallthru
        _
      // Predicated region
      $region25: #{resnet50_head_forward.1} parent=11 // pred_check
        %p193 = pneg %p122
      $region26: #{resnet50_head_forward.1} parent=11 // pred_check_branch
        %195 = sbr.rel (%p193) target = $region28
      $region27: #{resnet50_head_forward.1} parent=11 // pred_region
        _
      $region28: #{resnet50_head_forward.1} parent=11 // pred_fallthru
        _
      // Predicated region
      $region29: #{resnet50_head_forward.1} parent=11 // pred_check
        %p196 = pneg %p143
      $region30: #{resnet50_head_forward.1} parent=11 // pred_check_branch
        %198 = sbr.rel (%p196) target = $region32
      $region31: #{resnet50_head_forward.1} parent=11 // pred_region
        _
      $region32: #{resnet50_head_forward.1} parent=11 // pred_fallthru
        _
    $region12: #{resnet50_head_forward.1} parent=5 // pred_fallthru
      _
    %p199 = scmp.lt.s32.totalorder %s12, 2
    // Predicated region
    $region33: #{resnet50_head_forward.1} parent=5 // pred_check
      %p200 = pneg %p199
    $region34: #{resnet50_head_forward.1} parent=5 // pred_check_branch
      %202 = sbr.rel (%p200) target = $region36
    $region35: #{resnet50_head_forward.1} parent=5 // pred_region
      // Predicated region
      $region37: #{resnet50_head_forward.1} parent=35 // pred_check
        %p203 = pneg %p32
      $region38: #{resnet50_head_forward.1} parent=35 // pred_check_branch
        %205 = sbr.rel (%p203) target = $region40
      $region39: #{resnet50_head_forward.1} parent=35 // pred_region
        %s206 = smul.u32 32, %s12
        %p207 = scmp.lt.s32.totalorder %s206, 63
        %s208 = scalar_select %p207, %s206, 63
        %s209 = smul.addr %s208, 5
        %s210 = smul.addr %s209, 8
        %s211 = scalar_lea.vmem %s0, %s210
        %s212 = smul.u32 32, %s12
      $region40: #{resnet50_head_forward.1} parent=35 // pred_fallthru
        _
    $region36: #{resnet50_head_forward.1} parent=5 // pred_fallthru
      _
    %p213 = scmp.le.s32.totalorder 1, %s12
    %p214 = scmp.lt.s32.totalorder %s12, 3
    %p215 = pnand %p213, %p214
    %p216 = pneg %p215
    // Predicated region
    $region41: #{resnet50_head_forward.1} parent=5 // pred_check
      _
    $region42: #{resnet50_head_forward.1} parent=5 // pred_check_branch
      %218 = sbr.rel (%p215) target = $region44
    $region43: #{resnet50_head_forward.1} parent=5 // pred_region
      %s219 = ssub.s32 %s12, 1
      %s220 = smul.u32 32, %s17
      %p221 = scmp.lt.s32.totalorder %s220, 63
      %s222 = scalar_select %p221, %s220, 63
      %s223 = smul.addr %s222, 5
      %s224 = smul.addr %s223, 8
      %s225 = scalar_lea.vmem %s0, %s224
      %p226 = pneg %p38
      %p227 = pneg %p35
      %p228 = pneg %p59
      %p229 = pneg %p56
      %p230 = pneg %p80
      %p231 = pneg %p77
      %p232 = pneg %p101
      %p233 = pneg %p98
      %p234 = pneg %p122
      %p235 = pneg %p119
      %p236 = pneg %p143
      %p237 = pneg %p140
      %p238 = pneg %p169
      %p239 = pneg %p166
      %s240 = smul.u32 32, %s17
      %p241 = scmp.lt.s32.totalorder %s240, 63
      %s242 = scalar_select %p241, %s240, 63
      %s243 = smul.addr %s242, 8
      %s244 = scalar_lea.vmem %s6, %s243
      %s245 = smul.u32 32, %s17
      %p246 = scmp.lt.s32.totalorder %s245, 63
      %s247 = scalar_select %p246, %s245, 63
      %s248 = smul.addr %s247, 5
      %s249 = smul.addr %s248, 8
      %s250 = scalar_lea.vmem %s0, %s249
      %s251 = smul.u32 32, %s17
      %s252 = smul.u32 32, %s17
      %p253 = scmp.lt.s32.totalorder %s252, 63
      %s254 = scalar_select %p253, %s252, 63
      %s255 = smul.addr %s254, 8
      %s256 = scalar_lea.vmem %s6, %s255
      %s257 = smul.u32 32, %s17
      %v258 = vld [vmem:[%s250] sm:$0xff]
      %v259 = vld [vmem:[%s250 + $0x8] sm:$0xff]
      %v260 = vld [vmem:[%s250 + $0x10] sm:$0xff]
      %v261 = vld [vmem:[%s250 + $0x18] sm:$0xff]
      %v262 = vld [vmem:[%s250 + $0x20] sm:$0xff]
      %v263 = vld [vmem:[%s250 + $0x28] sm:$0xff]
      %v264 = vld [vmem:[%s250 + $0x30] sm:$0xff]
      %v265 = vld [vmem:[%s250 + $0x38] sm:$0xff]
      %v266 = vld [vmem:[%s250 + $0x40] sm:$0xff]
      %v267 = vld [vmem:[%s250 + $0x48] sm:$0xff]
      %v268 = vld [vmem:[%s250 + $0x50] sm:$0xff]
      %v269 = vld [vmem:[%s250 + $0x58] sm:$0xff]
      %v270 = vld [vmem:[%s250 + $0x60] sm:$0xff]
      %v271 = vld [vmem:[%s250 + $0x68] sm:$0xff]
      %v272 = vld [vmem:[%s250 + $0x70] sm:$0xff]
      %v273 = vld [vmem:[%s250 + $0x78] sm:$0xff]
      %v274 = vld [vmem:[%s250 + $0x80] sm:$0xff]
      %v275 = vld [vmem:[%s250 + $0x88] sm:$0xff]
      %v276 = vld [vmem:[%s250 + $0x90] sm:$0xff]
      %v277 = vld [vmem:[%s250 + $0x98] sm:$0xff]
      %v278 = vld [vmem:[%s250 + $0xa0] sm:$0xff]
      %v279 = vld [vmem:[%s250 + $0xa8] sm:$0xff]
      %v280 = vld [vmem:[%s250 + $0xb0] sm:$0xff]
      %v281 = vld [vmem:[%s250 + $0xb8] sm:$0xff]
      %v282 = vld [vmem:[%s250 + $0xc0] sm:$0xff]
      %v283 = vld [vmem:[%s250 + $0xc8] sm:$0xff]
      %v284 = vld [vmem:[%s250 + $0xd0] sm:$0xff]
      %v285 = vld [vmem:[%s250 + $0xd8] sm:$0xff]
      %v286 = vld [vmem:[%s250 + $0xe0] sm:$0xff]
      %v287 = vld [vmem:[%s250 + $0xe8] sm:$0xff]
      %v288 = vld [vmem:[%s250 + $0xf0] sm:$0xff]
      %v289 = vld [vmem:[%s250 + $0xf8] sm:$0xff]
      %v290 = vld [vmem:[%s250 + $0x100] sm:$0xff]
      %v291 = vld [vmem:[%s250 + $0x108] sm:$0xff]
      %v292 = vld [vmem:[%s250 + $0x110] sm:$0xff]
      %v293 = vld [vmem:[%s250 + $0x118] sm:$0xff]
      %v294 = vld [vmem:[%s250 + $0x120] sm:$0xff]
      %v295 = vld [vmem:[%s250 + $0x128] sm:$0xff]
      %v296 = vld [vmem:[%s250 + $0x130] sm:$0xff]
      %v297 = vld [vmem:[%s250 + $0x138] sm:$0xff]
      %v298 = vld [vmem:[%s250 + $0x140] sm:$0xff]
      %v299 = vld [vmem:[%s250 + $0x148] sm:$0xff]
      %v300 = vld [vmem:[%s250 + $0x150] sm:$0xff]
      %v301 = vld [vmem:[%s250 + $0x158] sm:$0xff]
      %v302 = vld [vmem:[%s250 + $0x160] sm:$0xff]
      %v303 = vld [vmem:[%s250 + $0x168] sm:$0xff]
      %v304 = vld [vmem:[%s250 + $0x170] sm:$0xff]
      %v305 = vld [vmem:[%s250 + $0x178] sm:$0xff]
      %v306 = vld [vmem:[%s250 + $0x180] sm:$0xff]
      %v307 = vld [vmem:[%s250 + $0x188] sm:$0xff]
      %v308 = vld [vmem:[%s250 + $0x190] sm:$0xff]
      %v309 = vld [vmem:[%s250 + $0x198] sm:$0xff]
      %v310 = vld [vmem:[%s250 + $0x1a0] sm:$0xff]
      %v311 = vld [vmem:[%s250 + $0x1a8] sm:$0xff]
      %v312 = vld [vmem:[%s250 + $0x1b0] sm:$0xff]
      %v313 = vld [vmem:[%s250 + $0x1b8] sm:$0xff]
      %v314 = vld [vmem:[%s250 + $0x1c0] sm:$0xff]
      %v315 = vld [vmem:[%s250 + $0x1c8] sm:$0xff]
      %v316 = vld [vmem:[%s250 + $0x1d0] sm:$0xff]
      %v317 = vld [vmem:[%s250 + $0x1d8] sm:$0xff]
      %v318 = vld [vmem:[%s250 + $0x1e0] sm:$0xff]
      %v319 = vld [vmem:[%s250 + $0x1e8] sm:$0xff]
      %v320 = vld [vmem:[%s250 + $0x1f0] sm:$0xff]
      %v321 = vld [vmem:[%s250 + $0x1f8] sm:$0xff]
      %v322 = vld [vmem:[%s250 + $0x200] sm:$0xff]
      %v323 = vld [vmem:[%s250 + $0x208] sm:$0xff]
      %v324 = vld [vmem:[%s250 + $0x210] sm:$0xff]
      %v325 = vld [vmem:[%s250 + $0x218] sm:$0xff]
      %v326 = vld [vmem:[%s250 + $0x220] sm:$0xff]
      %v327 = vld [vmem:[%s250 + $0x228] sm:$0xff]
      %v328 = vld [vmem:[%s250 + $0x230] sm:$0xff]
      %v329 = vld [vmem:[%s250 + $0x238] sm:$0xff]
      %v330 = vld [vmem:[%s250 + $0x240] sm:$0xff]
      %v331 = vld [vmem:[%s250 + $0x248] sm:$0xff]
      %v332 = vld [vmem:[%s250 + $0x250] sm:$0xff]
      %v333 = vld [vmem:[%s250 + $0x258] sm:$0xff]
      %v334 = vld [vmem:[%s250 + $0x260] sm:$0xff]
      %v335 = vld [vmem:[%s250 + $0x268] sm:$0xff]
      %v336 = vld [vmem:[%s250 + $0x270] sm:$0xff]
      %v337 = vld [vmem:[%s250 + $0x278] sm:$0xff]
      %v338 = vld [vmem:[%s250 + $0x280] sm:$0xff]
      %v339 = vld [vmem:[%s250 + $0x288] sm:$0xff]
      %v340 = vld [vmem:[%s250 + $0x290] sm:$0xff]
      %v341 = vld [vmem:[%s250 + $0x298] sm:$0xff]
      %v342 = vld [vmem:[%s250 + $0x2a0] sm:$0xff]
      %v343 = vld [vmem:[%s250 + $0x2a8] sm:$0xff]
      %v344 = vld [vmem:[%s250 + $0x2b0] sm:$0xff]
      %v345 = vld [vmem:[%s250 + $0x2b8] sm:$0xff]
      %v346 = vld [vmem:[%s250 + $0x2c0] sm:$0xff]
      %v347 = vld [vmem:[%s250 + $0x2c8] sm:$0xff]
      %v348 = vld [vmem:[%s250 + $0x2d0] sm:$0xff]
      %v349 = vld [vmem:[%s250 + $0x2d8] sm:$0xff]
      %v350 = vld [vmem:[%s250 + $0x2e0] sm:$0xff]
      %v351 = vld [vmem:[%s250 + $0x2e8] sm:$0xff]
      %v352 = vld [vmem:[%s250 + $0x2f0] sm:$0xff]
      %v353 = vld [vmem:[%s250 + $0x2f8] sm:$0xff]
      %v354 = vld [vmem:[%s250 + $0x300] sm:$0xff]
      %v355 = vld [vmem:[%s250 + $0x308] sm:$0xff]
      %v356 = vld [vmem:[%s250 + $0x310] sm:$0xff]
      %v357 = vld [vmem:[%s250 + $0x318] sm:$0xff]
      %v358 = vld [vmem:[%s250 + $0x320] sm:$0xff]
      %v359 = vld [vmem:[%s250 + $0x328] sm:$0xff]
      %v360 = vld [vmem:[%s250 + $0x330] sm:$0xff]
      %v361 = vld [vmem:[%s250 + $0x338] sm:$0xff]
      %v362 = vld [vmem:[%s250 + $0x340] sm:$0xff]
      %v363 = vld [vmem:[%s250 + $0x348] sm:$0xff]
      %v364 = vld [vmem:[%s250 + $0x350] sm:$0xff]
      %v365 = vld [vmem:[%s250 + $0x358] sm:$0xff]
      %v366 = vld [vmem:[%s250 + $0x360] sm:$0xff]
      %v367 = vld [vmem:[%s250 + $0x368] sm:$0xff]
      %v368 = vld [vmem:[%s250 + $0x370] sm:$0xff]
      %v369 = vld [vmem:[%s250 + $0x378] sm:$0xff]
      %v370 = vld [vmem:[%s250 + $0x380] sm:$0xff]
      %v371 = vld [vmem:[%s250 + $0x388] sm:$0xff]
      %v372 = vld [vmem:[%s250 + $0x390] sm:$0xff]
      %v373 = vld [vmem:[%s250 + $0x398] sm:$0xff]
      %v374 = vld [vmem:[%s250 + $0x3a0] sm:$0xff]
      %v375 = vld [vmem:[%s250 + $0x3a8] sm:$0xff]
      %v376 = vld [vmem:[%s250 + $0x3b0] sm:$0xff]
      %v377 = vld [vmem:[%s250 + $0x3b8] sm:$0xff]
      %v378 = vld [vmem:[%s250 + $0x3c0] sm:$0xff]
      %v379 = vld [vmem:[%s250 + $0x3c8] sm:$0xff]
      %v380 = vld [vmem:[%s250 + $0x3d0] sm:$0xff]
      %v381 = vld [vmem:[%s250 + $0x3d8] sm:$0xff]
      %v382 = vld [vmem:[%s250 + $0x3e0] sm:$0xff]
      %v383 = vld [vmem:[%s250 + $0x3e8] sm:$0xff]
      %v384 = vld [vmem:[%s250 + $0x3f0] sm:$0xff]
      %v385 = vld [vmem:[%s250 + $0x3f8] sm:$0xff]
      %v386 = vld [vmem:[%s250 + $0x400] sm:$0xff]
      %v387 = vld [vmem:[%s250 + $0x408] sm:$0xff]
      %v388 = vld [vmem:[%s250 + $0x410] sm:$0xff]
      %v389 = vld [vmem:[%s250 + $0x418] sm:$0xff]
      %v390 = vld [vmem:[%s250 + $0x420] sm:$0xff]
      %v391 = vld [vmem:[%s250 + $0x428] sm:$0xff]
      %v392 = vld [vmem:[%s250 + $0x430] sm:$0xff]
      %v393 = vld [vmem:[%s250 + $0x438] sm:$0xff]
      %v394 = vld [vmem:[%s250 + $0x440] sm:$0xff]
      %v395 = vld [vmem:[%s250 + $0x448] sm:$0xff]
      %v396 = vld [vmem:[%s250 + $0x450] sm:$0xff]
      %v397 = vld [vmem:[%s250 + $0x458] sm:$0xff]
      %v398 = vld [vmem:[%s250 + $0x460] sm:$0xff]
      %v399 = vld [vmem:[%s250 + $0x468] sm:$0xff]
      %v400 = vld [vmem:[%s250 + $0x470] sm:$0xff]
      %v401 = vld [vmem:[%s250 + $0x478] sm:$0xff]
      %v402 = vld [vmem:[%s250 + $0x480] sm:$0xff]
      %v403 = vld [vmem:[%s250 + $0x488] sm:$0xff]
      %v404 = vld [vmem:[%s250 + $0x490] sm:$0xff]
      %v405 = vld [vmem:[%s250 + $0x498] sm:$0xff]
      %v406 = vld [vmem:[%s250 + $0x4a0] sm:$0xff]
      %v407 = vld [vmem:[%s250 + $0x4a8] sm:$0xff]
      %v408 = vld [vmem:[%s250 + $0x4b0] sm:$0xff]
      %v409 = vld [vmem:[%s250 + $0x4b8] sm:$0xff]
      %v410 = vld [vmem:[%s250 + $0x4c0] sm:$0xff]
      %v411 = vld [vmem:[%s250 + $0x4c8] sm:$0xff]
      %v412 = vld [vmem:[%s250 + $0x4d0] sm:$0xff]
      %v413 = vld [vmem:[%s250 + $0x4d8] sm:$0xff]
      %v414 = vld [vmem:[%s250 + $0x4e0] sm:$0xff]
      %v415 = vld [vmem:[%s250 + $0x4e8] sm:$0xff]
      %v416 = vld [vmem:[%s250 + $0x4f0] sm:$0xff]
      %v417 = vld [vmem:[%s250 + $0x4f8] sm:$0xff]
      %v418 = vld [vmem:[%s1] sm:$0xff]
      %v419 = vld [vmem:[%s1 + $0x8] sm:$0xff]
      %v420 = vld [vmem:[%s1 + $0x10] sm:$0xff]
      %v421 = vld [vmem:[%s1 + $0x18] sm:$0xff]
      %v422 = vld [vmem:[%s1 + $0x20] sm:$0xff]
      %v423 = vld [vmem:[%s1 + $0x28] sm:$0xff]
      %v424 = vld [vmem:[%s1 + $0x30] sm:$0xff]
      %v425 = vld [vmem:[%s1 + $0x38] sm:$0xff]
      %v426 = vld [vmem:[%s1 + $0x40] sm:$0xff]
      %v427 = vld [vmem:[%s1 + $0x48] sm:$0xff]
      %v428 = vld [vmem:[%s1 + $0x50] sm:$0xff]
      %v429 = vld [vmem:[%s1 + $0x58] sm:$0xff]
      %v430 = vld [vmem:[%s1 + $0x60] sm:$0xff]
      %v431 = vld [vmem:[%s1 + $0x68] sm:$0xff]
      %v432 = vld [vmem:[%s1 + $0x70] sm:$0xff]
      %v433 = vld [vmem:[%s1 + $0x78] sm:$0xff]
      %v434 = vld [vmem:[%s1 + $0x80] sm:$0xff]
      %v435 = vld [vmem:[%s1 + $0x88] sm:$0xff]
      %v436 = vld [vmem:[%s1 + $0x90] sm:$0xff]
      %v437 = vld [vmem:[%s1 + $0x98] sm:$0xff]
      %v438 = vld [vmem:[%s1 + $0xa0] sm:$0xff]
      %v439 = vld [vmem:[%s1 + $0xa8] sm:$0xff]
      %v440 = vld [vmem:[%s1 + $0xb0] sm:$0xff]
      %v441 = vld [vmem:[%s1 + $0xb8] sm:$0xff]
      %v442 = vld [vmem:[%s1 + $0xc0] sm:$0xff]
      %v443 = vld [vmem:[%s1 + $0xc8] sm:$0xff]
      %v444 = vld [vmem:[%s1 + $0xd0] sm:$0xff]
      %v445 = vld [vmem:[%s1 + $0xd8] sm:$0xff]
      %v446 = vld [vmem:[%s1 + $0xe0] sm:$0xff]
      %v447 = vld [vmem:[%s1 + $0xe8] sm:$0xff]
      %v448 = vld [vmem:[%s1 + $0xf0] sm:$0xff]
      %v449 = vld [vmem:[%s1 + $0xf8] sm:$0xff]
      %v450 = vld [vmem:[%s1 + $0x100] sm:$0xff]
      %v451 = vld [vmem:[%s1 + $0x108] sm:$0xff]
      %v452 = vld [vmem:[%s1 + $0x110] sm:$0xff]
      %v453 = vld [vmem:[%s1 + $0x118] sm:$0xff]
      %v454 = vld [vmem:[%s1 + $0x120] sm:$0xff]
      %v455 = vld [vmem:[%s1 + $0x128] sm:$0xff]
      %v456 = vld [vmem:[%s1 + $0x130] sm:$0xff]
      %v457 = vld [vmem:[%s1 + $0x138] sm:$0xff]
      %v458 = vld [vmem:[%s1 + $0x140] sm:$0xff]
      %v459 = vld [vmem:[%s1 + $0x148] sm:$0xff]
      %v460 = vld [vmem:[%s1 + $0x150] sm:$0xff]
      %v461 = vld [vmem:[%s1 + $0x158] sm:$0xff]
      %v462 = vld [vmem:[%s1 + $0x160] sm:$0xff]
      %v463 = vld [vmem:[%s1 + $0x168] sm:$0xff]
      %v464 = vld [vmem:[%s1 + $0x170] sm:$0xff]
      %v465 = vld [vmem:[%s1 + $0x178] sm:$0xff]
      %v466 = vld [vmem:[%s1 + $0x180] sm:$0xff]
      %v467 = vld [vmem:[%s1 + $0x188] sm:$0xff]
      %v468 = vld [vmem:[%s1 + $0x190] sm:$0xff]
      %v469 = vld [vmem:[%s1 + $0x198] sm:$0xff]
      %v470 = vld [vmem:[%s1 + $0x1a0] sm:$0xff]
      %v471 = vld [vmem:[%s1 + $0x1a8] sm:$0xff]
      %v472 = vld [vmem:[%s1 + $0x1b0] sm:$0xff]
      %v473 = vld [vmem:[%s1 + $0x1b8] sm:$0xff]
      %v474 = vld [vmem:[%s1 + $0x1c0] sm:$0xff]
      %v475 = vld [vmem:[%s1 + $0x1c8] sm:$0xff]
      %v476 = vld [vmem:[%s1 + $0x1d0] sm:$0xff]
      %v477 = vld [vmem:[%s1 + $0x1d8] sm:$0xff]
      %v478 = vld [vmem:[%s1 + $0x1e0] sm:$0xff]
      %v479 = vld [vmem:[%s1 + $0x1e8] sm:$0xff]
      %v480 = vld [vmem:[%s1 + $0x1f0] sm:$0xff]
      %v481 = vld [vmem:[%s1 + $0x1f8] sm:$0xff]
      %v482 = vld [vmem:[%s1 + $0x200] sm:$0xff]
      %v483 = vld [vmem:[%s1 + $0x208] sm:$0xff]
      %v484 = vld [vmem:[%s1 + $0x210] sm:$0xff]
      %v485 = vld [vmem:[%s1 + $0x218] sm:$0xff]
      %v486 = vld [vmem:[%s1 + $0x220] sm:$0xff]
      %v487 = vld [vmem:[%s1 + $0x228] sm:$0xff]
      %v488 = vld [vmem:[%s1 + $0x230] sm:$0xff]
      %v489 = vld [vmem:[%s1 + $0x238] sm:$0xff]
      %v490 = vld [vmem:[%s1 + $0x240] sm:$0xff]
      %v491 = vld [vmem:[%s1 + $0x248] sm:$0xff]
      %v492 = vld [vmem:[%s1 + $0x250] sm:$0xff]
      %v493 = vld [vmem:[%s1 + $0x258] sm:$0xff]
      %v494 = vld [vmem:[%s1 + $0x260] sm:$0xff]
      %v495 = vld [vmem:[%s1 + $0x268] sm:$0xff]
      %v496 = vld [vmem:[%s1 + $0x270] sm:$0xff]
      %v497 = vld [vmem:[%s1 + $0x278] sm:$0xff]
      %v498 = vld [vmem:[%s1 + $0x280] sm:$0xff]
      %v499 = vld [vmem:[%s1 + $0x288] sm:$0xff]
      %v500 = vld [vmem:[%s1 + $0x290] sm:$0xff]
      %v501 = vld [vmem:[%s1 + $0x298] sm:$0xff]
      %v502 = vld [vmem:[%s1 + $0x2a0] sm:$0xff]
      %v503 = vld [vmem:[%s1 + $0x2a8] sm:$0xff]
      %v504 = vld [vmem:[%s1 + $0x2b0] sm:$0xff]
      %v505 = vld [vmem:[%s1 + $0x2b8] sm:$0xff]
      %v506 = vld [vmem:[%s1 + $0x2c0] sm:$0xff]
      %v507 = vld [vmem:[%s1 + $0x2c8] sm:$0xff]
      %v508 = vld [vmem:[%s1 + $0x2d0] sm:$0xff]
      %v509 = vld [vmem:[%s1 + $0x2d8] sm:$0xff]
      %v510 = vld [vmem:[%s1 + $0x2e0] sm:$0xff]
      %v511 = vld [vmem:[%s1 + $0x2e8] sm:$0xff]
      %v512 = vld [vmem:[%s1 + $0x2f0] sm:$0xff]
      %v513 = vld [vmem:[%s1 + $0x2f8] sm:$0xff]
      %v514 = vld [vmem:[%s1 + $0x300] sm:$0xff]
      %v515 = vld [vmem:[%s1 + $0x308] sm:$0xff]
      %v516 = vld [vmem:[%s1 + $0x310] sm:$0xff]
      %v517 = vld [vmem:[%s1 + $0x318] sm:$0xff]
      %v518 = vld [vmem:[%s1 + $0x320] sm:$0xff]
      %v519 = vld [vmem:[%s1 + $0x328] sm:$0xff]
      %v520 = vld [vmem:[%s1 + $0x330] sm:$0xff]
      %v521 = vld [vmem:[%s1 + $0x338] sm:$0xff]
      %v522 = vld [vmem:[%s1 + $0x340] sm:$0xff]
      %v523 = vld [vmem:[%s1 + $0x348] sm:$0xff]
      %v524 = vld [vmem:[%s1 + $0x350] sm:$0xff]
      %v525 = vld [vmem:[%s1 + $0x358] sm:$0xff]
      %v526 = vld [vmem:[%s1 + $0x360] sm:$0xff]
      %v527 = vld [vmem:[%s1 + $0x368] sm:$0xff]
      %v528 = vld [vmem:[%s1 + $0x370] sm:$0xff]
      %v529 = vld [vmem:[%s1 + $0x378] sm:$0xff]
      %v530 = vld [vmem:[%s1 + $0x380] sm:$0xff]
      %v531 = vld [vmem:[%s1 + $0x388] sm:$0xff]
      %v532 = vld [vmem:[%s1 + $0x390] sm:$0xff]
      %v533 = vld [vmem:[%s1 + $0x398] sm:$0xff]
      %v534 = vld [vmem:[%s1 + $0x3a0] sm:$0xff]
      %v535 = vld [vmem:[%s1 + $0x3a8] sm:$0xff]
      %v536 = vld [vmem:[%s1 + $0x3b0] sm:$0xff]
      %v537 = vld [vmem:[%s1 + $0x3b8] sm:$0xff]
      %v538 = vld [vmem:[%s1 + $0x3c0] sm:$0xff]
      %v539 = vld [vmem:[%s1 + $0x3c8] sm:$0xff]
      %v540 = vld [vmem:[%s1 + $0x3d0] sm:$0xff]
      %v541 = vld [vmem:[%s1 + $0x3d8] sm:$0xff]
      %v542 = vld [vmem:[%s1 + $0x3e0] sm:$0xff]
      %v543 = vld [vmem:[%s1 + $0x3e8] sm:$0xff]
      %v544 = vld [vmem:[%s1 + $0x3f0] sm:$0xff]
      %v545 = vld [vmem:[%s1 + $0x3f8] sm:$0xff]
      %v546 = vld [vmem:[%s1 + $0x400] sm:$0xff]
      %v547 = vld [vmem:[%s1 + $0x408] sm:$0xff]
      %v548 = vld [vmem:[%s1 + $0x410] sm:$0xff]
      %v549 = vld [vmem:[%s1 + $0x418] sm:$0xff]
      %v550 = vld [vmem:[%s1 + $0x420] sm:$0xff]
      %v551 = vld [vmem:[%s1 + $0x428] sm:$0xff]
      %v552 = vld [vmem:[%s1 + $0x430] sm:$0xff]
      %v553 = vld [vmem:[%s1 + $0x438] sm:$0xff]
      %v554 = vld [vmem:[%s1 + $0x440] sm:$0xff]
      %v555 = vld [vmem:[%s1 + $0x448] sm:$0xff]
      %v556 = vld [vmem:[%s1 + $0x450] sm:$0xff]
      %v557 = vld [vmem:[%s1 + $0x458] sm:$0xff]
      %v558 = vld [vmem:[%s1 + $0x460] sm:$0xff]
      %v559 = vld [vmem:[%s1 + $0x468] sm:$0xff]
      %v560 = vld [vmem:[%s1 + $0x470] sm:$0xff]
      %v561 = vld [vmem:[%s1 + $0x478] sm:$0xff]
      %vm562 = vcmask 523264
      %v564 = vsel %vm562, %v262, 0
      %v567 = vsel %vm562, %v267, 0
      %v570 = vsel %vm562, %v272, 0
      %v573 = vsel %vm562, %v277, 0
      %v576 = vsel %vm562, %v282, 0
      %v579 = vsel %vm562, %v287, 0
      %v582 = vsel %vm562, %v292, 0
      %v585 = vsel %vm562, %v297, 0
      %v588 = vsel %vm562, %v302, 0
      %v591 = vsel %vm562, %v307, 0
      %v594 = vsel %vm562, %v312, 0
      %v597 = vsel %vm562, %v317, 0
      %v600 = vsel %vm562, %v322, 0
      %v603 = vsel %vm562, %v327, 0
      %v606 = vsel %vm562, %v332, 0
      %v609 = vsel %vm562, %v337, 0
      %v612 = vsel %vm562, %v342, 0
      %v615 = vsel %vm562, %v347, 0
      %v618 = vsel %vm562, %v352, 0
      %v621 = vsel %vm562, %v357, 0
      %v624 = vsel %vm562, %v362, 0
      %v627 = vsel %vm562, %v367, 0
      %v630 = vsel %vm562, %v372, 0
      %v633 = vsel %vm562, %v377, 0
      %v636 = vsel %vm562, %v382, 0
      %v639 = vsel %vm562, %v387, 0
      %v642 = vsel %vm562, %v392, 0
      %v645 = vsel %vm562, %v397, 0
      %v648 = vsel %vm562, %v402, 0
      %v651 = vsel %vm562, %v407, 0
      %v654 = vsel %vm562, %v412, 0
      %v657 = vsel %vm562, %v417, 0
      %659 = vmatpush.msra.mxu0 %v448
      %660 = vmatpush.msra.mxu0 %v446
      %661 = vmatpush.msra.mxu0 %v444
      %662 = vmatpush.msra.mxu0 %v442
      %663 = vmatpush.msra.mxu0 %v440
      %664 = vmatpush.msra.mxu0 %v438
      %665 = vmatpush.msra.mxu0 %v436
      %666 = vmatpush.msra.mxu0 %v434
      %667 = vmatpush.msra.mxu0 %v432
      %668 = vmatpush.msra.mxu0 %v430
      %669 = vmatpush.msra.mxu0 %v428
      %670 = vmatpush.msra.mxu0 %v426
      %671 = vmatpush.msra.mxu0 %v424
      %672 = vmatpush.msra.mxu0 %v422
      %673 = vmatpush.msra.mxu0 %v420
      %674 = vmatpush.msra.mxu0 %v418
      %675 = vmatmul.f32.gmra.mxu0 %v258
      %v676 = vpop.f32.mrf.mxu0
      %v677 = vadd.f32 0.0, %v676
      %678 = vmatmul.f32.gmra.mxu0 %v263
      %v679 = vpop.f32.mrf.mxu0
      %v680 = vadd.f32 0.0, %v679
      %681 = vmatmul.f32.gmra.mxu0 %v268
      %v682 = vpop.f32.mrf.mxu0
      %v683 = vadd.f32 0.0, %v682
      %684 = vmatmul.f32.gmra.mxu0 %v273
      %v685 = vpop.f32.mrf.mxu0
      %v686 = vadd.f32 0.0, %v685
      %687 = vmatmul.f32.gmra.mxu0 %v278
      %v688 = vpop.f32.mrf.mxu0
      %v689 = vadd.f32 0.0, %v688
      %690 = vmatmul.f32.gmra.mxu0 %v283
      %v691 = vpop.f32.mrf.mxu0
      %v692 = vadd.f32 0.0, %v691
      %693 = vmatmul.f32.gmra.mxu0 %v288
      %v694 = vpop.f32.mrf.mxu0
      %v695 = vadd.f32 0.0, %v694
      %696 = vmatmul.f32.gmra.mxu0 %v293
      %v697 = vpop.f32.mrf.mxu0
      %v698 = vadd.f32 0.0, %v697
      %699 = vmatmul.f32.gmra.mxu0 %v298
      %v700 = vpop.f32.mrf.mxu0
      %v701 = vadd.f32 0.0, %v700
      %702 = vmatmul.f32.gmra.mxu0 %v303
      %v703 = vpop.f32.mrf.mxu0
      %v704 = vadd.f32 0.0, %v703
      %705 = vmatmul.f32.gmra.mxu0 %v308
      %v706 = vpop.f32.mrf.mxu0
      %v707 = vadd.f32 0.0, %v706
      %708 = vmatmul.f32.gmra.mxu0 %v313
      %v709 = vpop.f32.mrf.mxu0
      %v710 = vadd.f32 0.0, %v709
      %711 = vmatmul.f32.gmra.mxu0 %v318
      %v712 = vpop.f32.mrf.mxu0
      %v713 = vadd.f32 0.0, %v712
      %714 = vmatmul.f32.gmra.mxu0 %v323
      %v715 = vpop.f32.mrf.mxu0
      %v716 = vadd.f32 0.0, %v715
      %717 = vmatmul.f32.gmra.mxu0 %v328
      %v718 = vpop.f32.mrf.mxu0
      %v719 = vadd.f32 0.0, %v718
      %720 = vmatmul.f32.gmra.mxu0 %v333
      %v721 = vpop.f32.mrf.mxu0
      %v722 = vadd.f32 0.0, %v721
      %723 = vmatmul.f32.gmra.mxu0 %v338
      %v724 = vpop.f32.mrf.mxu0
      %v725 = vadd.f32 0.0, %v724
      %726 = vmatmul.f32.gmra.mxu0 %v343
      %v727 = vpop.f32.mrf.mxu0
      %v728 = vadd.f32 0.0, %v727
      %729 = vmatmul.f32.gmra.mxu0 %v348
      %v730 = vpop.f32.mrf.mxu0
      %v731 = vadd.f32 0.0, %v730
      %732 = vmatmul.f32.gmra.mxu0 %v353
      %v733 = vpop.f32.mrf.mxu0
      %v734 = vadd.f32 0.0, %v733
      %735 = vmatmul.f32.gmra.mxu0 %v358
      %v736 = vpop.f32.mrf.mxu0
      %v737 = vadd.f32 0.0, %v736
      %738 = vmatmul.f32.gmra.mxu0 %v363
      %v739 = vpop.f32.mrf.mxu0
      %v740 = vadd.f32 0.0, %v739
      %741 = vmatmul.f32.gmra.mxu0 %v368
      %v742 = vpop.f32.mrf.mxu0
      %v743 = vadd.f32 0.0, %v742
      %744 = vmatmul.f32.gmra.mxu0 %v373
      %v745 = vpop.f32.mrf.mxu0
      %v746 = vadd.f32 0.0, %v745
      %747 = vmatmul.f32.gmra.mxu0 %v378
      %v748 = vpop.f32.mrf.mxu0
      %v749 = vadd.f32 0.0, %v748
      %750 = vmatmul.f32.gmra.mxu0 %v383
      %v751 = vpop.f32.mrf.mxu0
      %v752 = vadd.f32 0.0, %v751
      %753 = vmatmul.f32.gmra.mxu0 %v388
      %v754 = vpop.f32.mrf.mxu0
      %v755 = vadd.f32 0.0, %v754
      %756 = vmatmul.f32.gmra.mxu0 %v393
      %v757 = vpop.f32.mrf.mxu0
      %v758 = vadd.f32 0.0, %v757
      %759 = vmatmul.f32.gmra.mxu0 %v398
      %v760 = vpop.f32.mrf.mxu0
      %v761 = vadd.f32 0.0, %v760
      %762 = vmatmul.f32.gmra.mxu0 %v403
      %v763 = vpop.f32.mrf.mxu0
      %v764 = vadd.f32 0.0, %v763
      %765 = vmatmul.f32.gmra.mxu0 %v408
      %v766 = vpop.f32.mrf.mxu0
      %v767 = vadd.f32 0.0, %v766
      %768 = vmatmul.f32.gmra.mxu0 %v413
      %v769 = vpop.f32.mrf.mxu0
      %v770 = vadd.f32 0.0, %v769
      %771 = vdwg.mxu0
      %772 = vmatpush.msra.mxu0 %v480
      %773 = vmatpush.msra.mxu0 %v478
      %774 = vmatpush.msra.mxu0 %v476
      %775 = vmatpush.msra.mxu0 %v474
      %776 = vmatpush.msra.mxu0 %v472
      %777 = vmatpush.msra.mxu0 %v470
      %778 = vmatpush.msra.mxu0 %v468
      %779 = vmatpush.msra.mxu0 %v466
      %780 = vmatpush.msra.mxu0 %v464
      %781 = vmatpush.msra.mxu0 %v462
      %782 = vmatpush.msra.mxu0 %v460
      %783 = vmatpush.msra.mxu0 %v458
      %784 = vmatpush.msra.mxu0 %v456
      %785 = vmatpush.msra.mxu0 %v454
      %786 = vmatpush.msra.mxu0 %v452
      %787 = vmatpush.msra.mxu0 %v450
      %788 = vmatmul.f32.gmra.mxu0 %v259
      %v789 = vpop.f32.mrf.mxu0
      %v790 = vadd.f32 %v677, %v789
      %791 = vmatmul.f32.gmra.mxu0 %v264
      %v792 = vpop.f32.mrf.mxu0
      %v793 = vadd.f32 %v680, %v792
      %794 = vmatmul.f32.gmra.mxu0 %v269
      %v795 = vpop.f32.mrf.mxu0
      %v796 = vadd.f32 %v683, %v795
      %797 = vmatmul.f32.gmra.mxu0 %v274
      %v798 = vpop.f32.mrf.mxu0
      %v799 = vadd.f32 %v686, %v798
      %800 = vmatmul.f32.gmra.mxu0 %v279
      %v801 = vpop.f32.mrf.mxu0
      %v802 = vadd.f32 %v689, %v801
      %803 = vmatmul.f32.gmra.mxu0 %v284
      %v804 = vpop.f32.mrf.mxu0
      %v805 = vadd.f32 %v692, %v804
      %806 = vmatmul.f32.gmra.mxu0 %v289
      %v807 = vpop.f32.mrf.mxu0
      %v808 = vadd.f32 %v695, %v807
      %809 = vmatmul.f32.gmra.mxu0 %v294
      %v810 = vpop.f32.mrf.mxu0
      %v811 = vadd.f32 %v698, %v810
      %812 = vmatmul.f32.gmra.mxu0 %v299
      %v813 = vpop.f32.mrf.mxu0
      %v814 = vadd.f32 %v701, %v813
      %815 = vmatmul.f32.gmra.mxu0 %v304
      %v816 = vpop.f32.mrf.mxu0
      %v817 = vadd.f32 %v704, %v816
      %818 = vmatmul.f32.gmra.mxu0 %v309
      %v819 = vpop.f32.mrf.mxu0
      %v820 = vadd.f32 %v707, %v819
      %821 = vmatmul.f32.gmra.mxu0 %v314
      %v822 = vpop.f32.mrf.mxu0
      %v823 = vadd.f32 %v710, %v822
      %824 = vmatmul.f32.gmra.mxu0 %v319
      %v825 = vpop.f32.mrf.mxu0
      %v826 = vadd.f32 %v713, %v825
      %827 = vmatmul.f32.gmra.mxu0 %v324
      %v828 = vpop.f32.mrf.mxu0
      %v829 = vadd.f32 %v716, %v828
      %830 = vmatmul.f32.gmra.mxu0 %v329
      %v831 = vpop.f32.mrf.mxu0
      %v832 = vadd.f32 %v719, %v831
      %833 = vmatmul.f32.gmra.mxu0 %v334
      %v834 = vpop.f32.mrf.mxu0
      %v835 = vadd.f32 %v722, %v834
      %836 = vmatmul.f32.gmra.mxu0 %v339
      %v837 = vpop.f32.mrf.mxu0
      %v838 = vadd.f32 %v725, %v837
      %839 = vmatmul.f32.gmra.mxu0 %v344
      %v840 = vpop.f32.mrf.mxu0
      %v841 = vadd.f32 %v728, %v840
      %842 = vmatmul.f32.gmra.mxu0 %v349
      %v843 = vpop.f32.mrf.mxu0
      %v844 = vadd.f32 %v731, %v843
      %845 = vmatmul.f32.gmra.mxu0 %v354
      %v846 = vpop.f32.mrf.mxu0
      %v847 = vadd.f32 %v734, %v846
      %848 = vmatmul.f32.gmra.mxu0 %v359
      %v849 = vpop.f32.mrf.mxu0
      %v850 = vadd.f32 %v737, %v849
      %851 = vmatmul.f32.gmra.mxu0 %v364
      %v852 = vpop.f32.mrf.mxu0
      %v853 = vadd.f32 %v740, %v852
      %854 = vmatmul.f32.gmra.mxu0 %v369
      %v855 = vpop.f32.mrf.mxu0
      %v856 = vadd.f32 %v743, %v855
      %857 = vmatmul.f32.gmra.mxu0 %v374
      %v858 = vpop.f32.mrf.mxu0
      %v859 = vadd.f32 %v746, %v858
      %860 = vmatmul.f32.gmra.mxu0 %v379
      %v861 = vpop.f32.mrf.mxu0
      %v862 = vadd.f32 %v749, %v861
      %863 = vmatmul.f32.gmra.mxu0 %v384
      %v864 = vpop.f32.mrf.mxu0
      %v865 = vadd.f32 %v752, %v864
      %866 = vmatmul.f32.gmra.mxu0 %v389
      %v867 = vpop.f32.mrf.mxu0
      %v868 = vadd.f32 %v755, %v867
      %869 = vmatmul.f32.gmra.mxu0 %v394
      %v870 = vpop.f32.mrf.mxu0
      %v871 = vadd.f32 %v758, %v870
      %872 = vmatmul.f32.gmra.mxu0 %v399
      %v873 = vpop.f32.mrf.mxu0
      %v874 = vadd.f32 %v761, %v873
      %875 = vmatmul.f32.gmra.mxu0 %v404
      %v876 = vpop.f32.mrf.mxu0
      %v877 = vadd.f32 %v764, %v876
      %878 = vmatmul.f32.gmra.mxu0 %v409
      %v879 = vpop.f32.mrf.mxu0
      %v880 = vadd.f32 %v767, %v879
      %881 = vmatmul.f32.gmra.mxu0 %v414
      %v882 = vpop.f32.mrf.mxu0
      %v883 = vadd.f32 %v770, %v882
      %884 = vdwg.mxu0
      %885 = vmatpush.msra.mxu0 %v512
      %886 = vmatpush.msra.mxu0 %v510
      %887 = vmatpush.msra.mxu0 %v508
      %888 = vmatpush.msra.mxu0 %v506
      %889 = vmatpush.msra.mxu0 %v504
      %890 = vmatpush.msra.mxu0 %v502
      %891 = vmatpush.msra.mxu0 %v500
      %892 = vmatpush.msra.mxu0 %v498
      %893 = vmatpush.msra.mxu0 %v496
      %894 = vmatpush.msra.mxu0 %v494
      %895 = vmatpush.msra.mxu0 %v492
      %896 = vmatpush.msra.mxu0 %v490
      %897 = vmatpush.msra.mxu0 %v488
      %898 = vmatpush.msra.mxu0 %v486
      %899 = vmatpush.msra.mxu0 %v484
      %900 = vmatpush.msra.mxu0 %v482
      %901 = vmatmul.f32.gmra.mxu0 %v260
      %v902 = vpop.f32.mrf.mxu0
      %v903 = vadd.f32 %v790, %v902
      %904 = vmatmul.f32.gmra.mxu0 %v265
      %v905 = vpop.f32.mrf.mxu0
      %v906 = vadd.f32 %v793, %v905
      %907 = vmatmul.f32.gmra.mxu0 %v270
      %v908 = vpop.f32.mrf.mxu0
      %v909 = vadd.f32 %v796, %v908
      %910 = vmatmul.f32.gmra.mxu0 %v275
      %v911 = vpop.f32.mrf.mxu0
      %v912 = vadd.f32 %v799, %v911
      %913 = vmatmul.f32.gmra.mxu0 %v280
      %v914 = vpop.f32.mrf.mxu0
      %v915 = vadd.f32 %v802, %v914
      %916 = vmatmul.f32.gmra.mxu0 %v285
      %v917 = vpop.f32.mrf.mxu0
      %v918 = vadd.f32 %v805, %v917
      %919 = vmatmul.f32.gmra.mxu0 %v290
      %v920 = vpop.f32.mrf.mxu0
      %v921 = vadd.f32 %v808, %v920
      %922 = vmatmul.f32.gmra.mxu0 %v295
      %v923 = vpop.f32.mrf.mxu0
      %v924 = vadd.f32 %v811, %v923
      %925 = vmatmul.f32.gmra.mxu0 %v300
      %v926 = vpop.f32.mrf.mxu0
      %v927 = vadd.f32 %v814, %v926
      %928 = vmatmul.f32.gmra.mxu0 %v305
      %v929 = vpop.f32.mrf.mxu0
      %v930 = vadd.f32 %v817, %v929
      %931 = vmatmul.f32.gmra.mxu0 %v310
      %v932 = vpop.f32.mrf.mxu0
      %v933 = vadd.f32 %v820, %v932
      %934 = vmatmul.f32.gmra.mxu0 %v315
      %v935 = vpop.f32.mrf.mxu0
      %v936 = vadd.f32 %v823, %v935
      %937 = vmatmul.f32.gmra.mxu0 %v320
      %v938 = vpop.f32.mrf.mxu0
      %v939 = vadd.f32 %v826, %v938
      %940 = vmatmul.f32.gmra.mxu0 %v325
      %v941 = vpop.f32.mrf.mxu0
      %v942 = vadd.f32 %v829, %v941
      %943 = vmatmul.f32.gmra.mxu0 %v330
      %v944 = vpop.f32.mrf.mxu0
      %v945 = vadd.f32 %v832, %v944
      %946 = vmatmul.f32.gmra.mxu0 %v335
      %v947 = vpop.f32.mrf.mxu0
      %v948 = vadd.f32 %v835, %v947
      %949 = vmatmul.f32.gmra.mxu0 %v340
      %v950 = vpop.f32.mrf.mxu0
      %v951 = vadd.f32 %v838, %v950
      %952 = vmatmul.f32.gmra.mxu0 %v345
      %v953 = vpop.f32.mrf.mxu0
      %v954 = vadd.f32 %v841, %v953
      %955 = vmatmul.f32.gmra.mxu0 %v350
      %v956 = vpop.f32.mrf.mxu0
      %v957 = vadd.f32 %v844, %v956
      %958 = vmatmul.f32.gmra.mxu0 %v355
      %v959 = vpop.f32.mrf.mxu0
      %v960 = vadd.f32 %v847, %v959
      %961 = vmatmul.f32.gmra.mxu0 %v360
      %v962 = vpop.f32.mrf.mxu0
      %v963 = vadd.f32 %v850, %v962
      %964 = vmatmul.f32.gmra.mxu0 %v365
      %v965 = vpop.f32.mrf.mxu0
      %v966 = vadd.f32 %v853, %v965
      %967 = vmatmul.f32.gmra.mxu0 %v370
      %v968 = vpop.f32.mrf.mxu0
      %v969 = vadd.f32 %v856, %v968
      %970 = vmatmul.f32.gmra.mxu0 %v375
      %v971 = vpop.f32.mrf.mxu0
      %v972 = vadd.f32 %v859, %v971
      %973 = vmatmul.f32.gmra.mxu0 %v380
      %v974 = vpop.f32.mrf.mxu0
      %v975 = vadd.f32 %v862, %v974
      %976 = vmatmul.f32.gmra.mxu0 %v385
      %v977 = vpop.f32.mrf.mxu0
      %v978 = vadd.f32 %v865, %v977
      %979 = vmatmul.f32.gmra.mxu0 %v390
      %v980 = vpop.f32.mrf.mxu0
      %v981 = vadd.f32 %v868, %v980
      %982 = vmatmul.f32.gmra.mxu0 %v395
      %v983 = vpop.f32.mrf.mxu0
      %v984 = vadd.f32 %v871, %v983
      %985 = vmatmul.f32.gmra.mxu0 %v400
      %v986 = vpop.f32.mrf.mxu0
      %v987 = vadd.f32 %v874, %v986
      %988 = vmatmul.f32.gmra.mxu0 %v405
      %v989 = vpop.f32.mrf.mxu0
      %v990 = vadd.f32 %v877, %v989
      %991 = vmatmul.f32.gmra.mxu0 %v410
      %v992 = vpop.f32.mrf.mxu0
      %v993 = vadd.f32 %v880, %v992
      %994 = vmatmul.f32.gmra.mxu0 %v415
      %v995 = vpop.f32.mrf.mxu0
      %v996 = vadd.f32 %v883, %v995
      %997 = vdwg.mxu0
      %998 = vmatpush.msra.mxu0 %v544
      %999 = vmatpush.msra.mxu0 %v542
      %1000 = vmatpush.msra.mxu0 %v540
      %1001 = vmatpush.msra.mxu0 %v538
      %1002 = vmatpush.msra.mxu0 %v536
      %1003 = vmatpush.msra.mxu0 %v534
      %1004 = vmatpush.msra.mxu0 %v532
      %1005 = vmatpush.msra.mxu0 %v530
      %1006 = vmatpush.msra.mxu0 %v528
      %1007 = vmatpush.msra.mxu0 %v526
      %1008 = vmatpush.msra.mxu0 %v524
      %1009 = vmatpush.msra.mxu0 %v522
      %1010 = vmatpush.msra.mxu0 %v520
      %1011 = vmatpush.msra.mxu0 %v518
      %1012 = vmatpush.msra.mxu0 %v516
      %1013 = vmatpush.msra.mxu0 %v514
      %1014 = vmatmul.f32.gmra.mxu0 %v261
      %v1015 = vpop.f32.mrf.mxu0
      %v1016 = vadd.f32 %v903, %v1015
      %1017 = vmatmul.f32.gmra.mxu0 %v266
      %v1018 = vpop.f32.mrf.mxu0
      %v1019 = vadd.f32 %v906, %v1018
      %1020 = vmatmul.f32.gmra.mxu0 %v271
      %v1021 = vpop.f32.mrf.mxu0
      %v1022 = vadd.f32 %v909, %v1021
      %1023 = vmatmul.f32.gmra.mxu0 %v276
      %v1024 = vpop.f32.mrf.mxu0
      %v1025 = vadd.f32 %v912, %v1024
      %1026 = vmatmul.f32.gmra.mxu0 %v281
      %v1027 = vpop.f32.mrf.mxu0
      %v1028 = vadd.f32 %v915, %v1027
      %1029 = vmatmul.f32.gmra.mxu0 %v286
      %v1030 = vpop.f32.mrf.mxu0
      %v1031 = vadd.f32 %v918, %v1030
      %1032 = vmatmul.f32.gmra.mxu0 %v291
      %v1033 = vpop.f32.mrf.mxu0
      %v1034 = vadd.f32 %v921, %v1033
      %1035 = vmatmul.f32.gmra.mxu0 %v296
      %v1036 = vpop.f32.mrf.mxu0
      %v1037 = vadd.f32 %v924, %v1036
      %1038 = vmatmul.f32.gmra.mxu0 %v301
      %v1039 = vpop.f32.mrf.mxu0
      %v1040 = vadd.f32 %v927, %v1039
      %1041 = vmatmul.f32.gmra.mxu0 %v306
      %v1042 = vpop.f32.mrf.mxu0
      %v1043 = vadd.f32 %v930, %v1042
      %1044 = vmatmul.f32.gmra.mxu0 %v311
      %v1045 = vpop.f32.mrf.mxu0
      %v1046 = vadd.f32 %v933, %v1045
      %1047 = vmatmul.f32.gmra.mxu0 %v316
      %v1048 = vpop.f32.mrf.mxu0
      %v1049 = vadd.f32 %v936, %v1048
      %1050 = vmatmul.f32.gmra.mxu0 %v321
      %v1051 = vpop.f32.mrf.mxu0
      %v1052 = vadd.f32 %v939, %v1051
      %1053 = vmatmul.f32.gmra.mxu0 %v326
      %v1054 = vpop.f32.mrf.mxu0
      %v1055 = vadd.f32 %v942, %v1054
      %1056 = vmatmul.f32.gmra.mxu0 %v331
      %v1057 = vpop.f32.mrf.mxu0
      %v1058 = vadd.f32 %v945, %v1057
      %1059 = vmatmul.f32.gmra.mxu0 %v336
      %v1060 = vpop.f32.mrf.mxu0
      %v1061 = vadd.f32 %v948, %v1060
      %1062 = vmatmul.f32.gmra.mxu0 %v341
      %v1063 = vpop.f32.mrf.mxu0
      %v1064 = vadd.f32 %v951, %v1063
      %1065 = vmatmul.f32.gmra.mxu0 %v346
      %v1066 = vpop.f32.mrf.mxu0
      %v1067 = vadd.f32 %v954, %v1066
      %1068 = vmatmul.f32.gmra.mxu0 %v351
      %v1069 = vpop.f32.mrf.mxu0
      %v1070 = vadd.f32 %v957, %v1069
      %1071 = vmatmul.f32.gmra.mxu0 %v356
      %v1072 = vpop.f32.mrf.mxu0
      %v1073 = vadd.f32 %v960, %v1072
      %1074 = vmatmul.f32.gmra.mxu0 %v361
      %v1075 = vpop.f32.mrf.mxu0
      %v1076 = vadd.f32 %v963, %v1075
      %1077 = vmatmul.f32.gmra.mxu0 %v366
      %v1078 = vpop.f32.mrf.mxu0
      %v1079 = vadd.f32 %v966, %v1078
      %1080 = vmatmul.f32.gmra.mxu0 %v371
      %v1081 = vpop.f32.mrf.mxu0
      %v1082 = vadd.f32 %v969, %v1081
      %1083 = vmatmul.f32.gmra.mxu0 %v376
      %v1084 = vpop.f32.mrf.mxu0
      %v1085 = vadd.f32 %v972, %v1084
      %1086 = vmatmul.f32.gmra.mxu0 %v381
      %v1087 = vpop.f32.mrf.mxu0
      %v1088 = vadd.f32 %v975, %v1087
      %1089 = vmatmul.f32.gmra.mxu0 %v386
      %v1090 = vpop.f32.mrf.mxu0
      %v1091 = vadd.f32 %v978, %v1090
      %1092 = vmatmul.f32.gmra.mxu0 %v391
      %v1093 = vpop.f32.mrf.mxu0
      %v1094 = vadd.f32 %v981, %v1093
      %1095 = vmatmul.f32.gmra.mxu0 %v396
      %v1096 = vpop.f32.mrf.mxu0
      %v1097 = vadd.f32 %v984, %v1096
      %1098 = vmatmul.f32.gmra.mxu0 %v401
      %v1099 = vpop.f32.mrf.mxu0
      %v1100 = vadd.f32 %v987, %v1099
      %1101 = vmatmul.f32.gmra.mxu0 %v406
      %v1102 = vpop.f32.mrf.mxu0
      %v1103 = vadd.f32 %v990, %v1102
      %1104 = vmatmul.f32.gmra.mxu0 %v411
      %v1105 = vpop.f32.mrf.mxu0
      %v1106 = vadd.f32 %v993, %v1105
      %1107 = vmatmul.f32.gmra.mxu0 %v416
      %v1108 = vpop.f32.mrf.mxu0
      %v1109 = vadd.f32 %v996, %v1108
      %1110 = vdwg.mxu0
      %1111 = vmatpush.msra.mxu0 0.0
      %1112 = vmatpush.msra.mxu0 0.0
      %1113 = vmatpush.msra.mxu0 0.0
      %1114 = vmatpush.msra.mxu0 0.0
      %1115 = vmatpush.msra.mxu0 0.0
      %1116 = vmatpush.msra.mxu0 0.0
      %1117 = vmatpush.msra.mxu0 0.0
      %1118 = vmatpush.msra.mxu0 0.0
      %1119 = vmatpush.msra.mxu0 %v560
      %1120 = vmatpush.msra.mxu0 %v558
      %1121 = vmatpush.msra.mxu0 %v556
      %1122 = vmatpush.msra.mxu0 %v554
      %1123 = vmatpush.msra.mxu0 %v552
      %1124 = vmatpush.msra.mxu0 %v550
      %1125 = vmatpush.msra.mxu0 %v548
      %1126 = vmatpush.msra.mxu0 %v546
      %1127 = vmatmul.f32.gmra.mxu0 %v564
      %v1128 = vpop.f32.mrf.mxu0
      %v1129 = vadd.f32 %v1016, %v1128
      %1130 = vmatmul.f32.gmra.mxu0 %v567
      %v1131 = vpop.f32.mrf.mxu0
      %v1132 = vadd.f32 %v1019, %v1131
      %1133 = vmatmul.f32.gmra.mxu0 %v570
      %v1134 = vpop.f32.mrf.mxu0
      %v1135 = vadd.f32 %v1022, %v1134
      %1136 = vmatmul.f32.gmra.mxu0 %v573
      %v1137 = vpop.f32.mrf.mxu0
      %v1138 = vadd.f32 %v1025, %v1137
      %1139 = vmatmul.f32.gmra.mxu0 %v576
      %v1140 = vpop.f32.mrf.mxu0
      %v1141 = vadd.f32 %v1028, %v1140
      %1142 = vmatmul.f32.gmra.mxu0 %v579
      %v1143 = vpop.f32.mrf.mxu0
      %v1144 = vadd.f32 %v1031, %v1143
      %1145 = vmatmul.f32.gmra.mxu0 %v582
      %v1146 = vpop.f32.mrf.mxu0
      %v1147 = vadd.f32 %v1034, %v1146
      %1148 = vmatmul.f32.gmra.mxu0 %v585
      %v1149 = vpop.f32.mrf.mxu0
      %v1150 = vadd.f32 %v1037, %v1149
      %1151 = vmatmul.f32.gmra.mxu0 %v588
      %v1152 = vpop.f32.mrf.mxu0
      %v1153 = vadd.f32 %v1040, %v1152
      %1154 = vmatmul.f32.gmra.mxu0 %v591
      %v1155 = vpop.f32.mrf.mxu0
      %v1156 = vadd.f32 %v1043, %v1155
      %1157 = vmatmul.f32.gmra.mxu0 %v594
      %v1158 = vpop.f32.mrf.mxu0
      %v1159 = vadd.f32 %v1046, %v1158
      %1160 = vmatmul.f32.gmra.mxu0 %v597
      %v1161 = vpop.f32.mrf.mxu0
      %v1162 = vadd.f32 %v1049, %v1161
      %1163 = vmatmul.f32.gmra.mxu0 %v600
      %v1164 = vpop.f32.mrf.mxu0
      %v1165 = vadd.f32 %v1052, %v1164
      %1166 = vmatmul.f32.gmra.mxu0 %v603
      %v1167 = vpop.f32.mrf.mxu0
      %v1168 = vadd.f32 %v1055, %v1167
      %1169 = vmatmul.f32.gmra.mxu0 %v606
      %v1170 = vpop.f32.mrf.mxu0
      %v1171 = vadd.f32 %v1058, %v1170
      %1172 = vmatmul.f32.gmra.mxu0 %v609
      %v1173 = vpop.f32.mrf.mxu0
      %v1174 = vadd.f32 %v1061, %v1173
      %1175 = vmatmul.f32.gmra.mxu0 %v612
      %v1176 = vpop.f32.mrf.mxu0
      %v1177 = vadd.f32 %v1064, %v1176
      %1178 = vmatmul.f32.gmra.mxu0 %v615
      %v1179 = vpop.f32.mrf.mxu0
      %v1180 = vadd.f32 %v1067, %v1179
      %1181 = vmatmul.f32.gmra.mxu0 %v618
      %v1182 = vpop.f32.mrf.mxu0
      %v1183 = vadd.f32 %v1070, %v1182
      %1184 = vmatmul.f32.gmra.mxu0 %v621
      %v1185 = vpop.f32.mrf.mxu0
      %v1186 = vadd.f32 %v1073, %v1185
      %1187 = vmatmul.f32.gmra.mxu0 %v624
      %v1188 = vpop.f32.mrf.mxu0
      %v1189 = vadd.f32 %v1076, %v1188
      %1190 = vmatmul.f32.gmra.mxu0 %v627
      %v1191 = vpop.f32.mrf.mxu0
      %v1192 = vadd.f32 %v1079, %v1191
      %1193 = vmatmul.f32.gmra.mxu0 %v630
      %v1194 = vpop.f32.mrf.mxu0
      %v1195 = vadd.f32 %v1082, %v1194
      %1196 = vmatmul.f32.gmra.mxu0 %v633
      %v1197 = vpop.f32.mrf.mxu0
      %v1198 = vadd.f32 %v1085, %v1197
      %1199 = vmatmul.f32.gmra.mxu0 %v636
      %v1200 = vpop.f32.mrf.mxu0
      %v1201 = vadd.f32 %v1088, %v1200
      %1202 = vmatmul.f32.gmra.mxu0 %v639
      %v1203 = vpop.f32.mrf.mxu0
      %v1204 = vadd.f32 %v1091, %v1203
      %1205 = vmatmul.f32.gmra.mxu0 %v642
      %v1206 = vpop.f32.mrf.mxu0
      %v1207 = vadd.f32 %v1094, %v1206
      %1208 = vmatmul.f32.gmra.mxu0 %v645
      %v1209 = vpop.f32.mrf.mxu0
      %v1210 = vadd.f32 %v1097, %v1209
      %1211 = vmatmul.f32.gmra.mxu0 %v648
      %v1212 = vpop.f32.mrf.mxu0
      %v1213 = vadd.f32 %v1100, %v1212
      %1214 = vmatmul.f32.gmra.mxu0 %v651
      %v1215 = vpop.f32.mrf.mxu0
      %v1216 = vadd.f32 %v1103, %v1215
      %1217 = vmatmul.f32.gmra.mxu0 %v654
      %v1218 = vpop.f32.mrf.mxu0
      %v1219 = vadd.f32 %v1106, %v1218
      %1220 = vmatmul.f32.gmra.mxu0 %v657
      %v1221 = vpop.f32.mrf.mxu0
      %v1222 = vadd.f32 %v1109, %v1221
      %1223 = vdwg.mxu0
      %1224 = vmatpush.msra.mxu0 %v449
      %1225 = vmatpush.msra.mxu0 %v447
      %1226 = vmatpush.msra.mxu0 %v445
      %1227 = vmatpush.msra.mxu0 %v443
      %1228 = vmatpush.msra.mxu0 %v441
      %1229 = vmatpush.msra.mxu0 %v439
      %1230 = vmatpush.msra.mxu0 %v437
      %1231 = vmatpush.msra.mxu0 %v435
      %1232 = vmatpush.msra.mxu0 %v433
      %1233 = vmatpush.msra.mxu0 %v431
      %1234 = vmatpush.msra.mxu0 %v429
      %1235 = vmatpush.msra.mxu0 %v427
      %1236 = vmatpush.msra.mxu0 %v425
      %1237 = vmatpush.msra.mxu0 %v423
      %1238 = vmatpush.msra.mxu0 %v421
      %1239 = vmatpush.msra.mxu0 %v419
      %1240 = vmatmul.f32.gmra.mxu0 %v258
      %v1241 = vpop.f32.mrf.mxu0
      %v1242 = vadd.f32 0.0, %v1241
      %1243 = vmatmul.f32.gmra.mxu0 %v263
      %v1244 = vpop.f32.mrf.mxu0
      %v1245 = vadd.f32 0.0, %v1244
      %1246 = vmatmul.f32.gmra.mxu0 %v268
      %v1247 = vpop.f32.mrf.mxu0
      %v1248 = vadd.f32 0.0, %v1247
      %1249 = vmatmul.f32.gmra.mxu0 %v273
      %v1250 = vpop.f32.mrf.mxu0
      %v1251 = vadd.f32 0.0, %v1250
      %1252 = vmatmul.f32.gmra.mxu0 %v278
      %v1253 = vpop.f32.mrf.mxu0
      %v1254 = vadd.f32 0.0, %v1253
      %1255 = vmatmul.f32.gmra.mxu0 %v283
      %v1256 = vpop.f32.mrf.mxu0
      %v1257 = vadd.f32 0.0, %v1256
      %1258 = vmatmul.f32.gmra.mxu0 %v288
      %v1259 = vpop.f32.mrf.mxu0
      %v1260 = vadd.f32 0.0, %v1259
      %1261 = vmatmul.f32.gmra.mxu0 %v293
      %v1262 = vpop.f32.mrf.mxu0
      %v1263 = vadd.f32 0.0, %v1262
      %1264 = vmatmul.f32.gmra.mxu0 %v298
      %v1265 = vpop.f32.mrf.mxu0
      %v1266 = vadd.f32 0.0, %v1265
      %1267 = vmatmul.f32.gmra.mxu0 %v303
      %v1268 = vpop.f32.mrf.mxu0
      %v1269 = vadd.f32 0.0, %v1268
      %1270 = vmatmul.f32.gmra.mxu0 %v308
      %v1271 = vpop.f32.mrf.mxu0
      %v1272 = vadd.f32 0.0, %v1271
      %1273 = vmatmul.f32.gmra.mxu0 %v313
      %v1274 = vpop.f32.mrf.mxu0
      %v1275 = vadd.f32 0.0, %v1274
      %1276 = vmatmul.f32.gmra.mxu0 %v318
      %v1277 = vpop.f32.mrf.mxu0
      %v1278 = vadd.f32 0.0, %v1277
      %1279 = vmatmul.f32.gmra.mxu0 %v323
      %v1280 = vpop.f32.mrf.mxu0
      %v1281 = vadd.f32 0.0, %v1280
      %1282 = vmatmul.f32.gmra.mxu0 %v328
      %v1283 = vpop.f32.mrf.mxu0
      %v1284 = vadd.f32 0.0, %v1283
      %1285 = vmatmul.f32.gmra.mxu0 %v333
      %v1286 = vpop.f32.mrf.mxu0
      %v1287 = vadd.f32 0.0, %v1286
      %1288 = vmatmul.f32.gmra.mxu0 %v338
      %v1289 = vpop.f32.mrf.mxu0
      %v1290 = vadd.f32 0.0, %v1289
      %1291 = vmatmul.f32.gmra.mxu0 %v343
      %v1292 = vpop.f32.mrf.mxu0
      %v1293 = vadd.f32 0.0, %v1292
      %1294 = vmatmul.f32.gmra.mxu0 %v348
      %v1295 = vpop.f32.mrf.mxu0
      %v1296 = vadd.f32 0.0, %v1295
      %1297 = vmatmul.f32.gmra.mxu0 %v353
      %v1298 = vpop.f32.mrf.mxu0
      %v1299 = vadd.f32 0.0, %v1298
      %1300 = vmatmul.f32.gmra.mxu0 %v358
      %v1301 = vpop.f32.mrf.mxu0
      %v1302 = vadd.f32 0.0, %v1301
      %1303 = vmatmul.f32.gmra.mxu0 %v363
      %v1304 = vpop.f32.mrf.mxu0
      %v1305 = vadd.f32 0.0, %v1304
      %1306 = vmatmul.f32.gmra.mxu0 %v368
      %v1307 = vpop.f32.mrf.mxu0
      %v1308 = vadd.f32 0.0, %v1307
      %1309 = vmatmul.f32.gmra.mxu0 %v373
      %v1310 = vpop.f32.mrf.mxu0
      %v1311 = vadd.f32 0.0, %v1310
      %1312 = vmatmul.f32.gmra.mxu0 %v378
      %v1313 = vpop.f32.mrf.mxu0
      %v1314 = vadd.f32 0.0, %v1313
      %1315 = vmatmul.f32.gmra.mxu0 %v383
      %v1316 = vpop.f32.mrf.mxu0
      %v1317 = vadd.f32 0.0, %v1316
      %1318 = vmatmul.f32.gmra.mxu0 %v388
      %v1319 = vpop.f32.mrf.mxu0
      %v1320 = vadd.f32 0.0, %v1319
      %1321 = vmatmul.f32.gmra.mxu0 %v393
      %v1322 = vpop.f32.mrf.mxu0
      %v1323 = vadd.f32 0.0, %v1322
      %1324 = vmatmul.f32.gmra.mxu0 %v398
      %v1325 = vpop.f32.mrf.mxu0
      %v1326 = vadd.f32 0.0, %v1325
      %1327 = vmatmul.f32.gmra.mxu0 %v403
      %v1328 = vpop.f32.mrf.mxu0
      %v1329 = vadd.f32 0.0, %v1328
      %1330 = vmatmul.f32.gmra.mxu0 %v408
      %v1331 = vpop.f32.mrf.mxu0
      %v1332 = vadd.f32 0.0, %v1331
      %1333 = vmatmul.f32.gmra.mxu0 %v413
      %v1334 = vpop.f32.mrf.mxu0
      %v1335 = vadd.f32 0.0, %v1334
      %1336 = vdwg.mxu0
      %1337 = vmatpush.msra.mxu0 %v481
      %1338 = vmatpush.msra.mxu0 %v479
      %1339 = vmatpush.msra.mxu0 %v477
      %1340 = vmatpush.msra.mxu0 %v475
      %1341 = vmatpush.msra.mxu0 %v473
      %1342 = vmatpush.msra.mxu0 %v471
      %1343 = vmatpush.msra.mxu0 %v469
      %1344 = vmatpush.msra.mxu0 %v467
      %1345 = vmatpush.msra.mxu0 %v465
      %1346 = vmatpush.msra.mxu0 %v463
      %1347 = vmatpush.msra.mxu0 %v461
      %1348 = vmatpush.msra.mxu0 %v459
      %1349 = vmatpush.msra.mxu0 %v457
      %1350 = vmatpush.msra.mxu0 %v455
      %1351 = vmatpush.msra.mxu0 %v453
      %1352 = vmatpush.msra.mxu0 %v451
      %1353 = vmatmul.f32.gmra.mxu0 %v259
      %v1354 = vpop.f32.mrf.mxu0
      %v1355 = vadd.f32 %v1242, %v1354
      %1356 = vmatmul.f32.gmra.mxu0 %v264
      %v1357 = vpop.f32.mrf.mxu0
      %v1358 = vadd.f32 %v1245, %v1357
      %1359 = vmatmul.f32.gmra.mxu0 %v269
      %v1360 = vpop.f32.mrf.mxu0
      %v1361 = vadd.f32 %v1248, %v1360
      %1362 = vmatmul.f32.gmra.mxu0 %v274
      %v1363 = vpop.f32.mrf.mxu0
      %v1364 = vadd.f32 %v1251, %v1363
      %1365 = vmatmul.f32.gmra.mxu0 %v279
      %v1366 = vpop.f32.mrf.mxu0
      %v1367 = vadd.f32 %v1254, %v1366
      %1368 = vmatmul.f32.gmra.mxu0 %v284
      %v1369 = vpop.f32.mrf.mxu0
      %v1370 = vadd.f32 %v1257, %v1369
      %1371 = vmatmul.f32.gmra.mxu0 %v289
      %v1372 = vpop.f32.mrf.mxu0
      %v1373 = vadd.f32 %v1260, %v1372
      %1374 = vmatmul.f32.gmra.mxu0 %v294
      %v1375 = vpop.f32.mrf.mxu0
      %v1376 = vadd.f32 %v1263, %v1375
      %1377 = vmatmul.f32.gmra.mxu0 %v299
      %v1378 = vpop.f32.mrf.mxu0
      %v1379 = vadd.f32 %v1266, %v1378
      %1380 = vmatmul.f32.gmra.mxu0 %v304
      %v1381 = vpop.f32.mrf.mxu0
      %v1382 = vadd.f32 %v1269, %v1381
      %1383 = vmatmul.f32.gmra.mxu0 %v309
      %v1384 = vpop.f32.mrf.mxu0
      %v1385 = vadd.f32 %v1272, %v1384
      %1386 = vmatmul.f32.gmra.mxu0 %v314
      %v1387 = vpop.f32.mrf.mxu0
      %v1388 = vadd.f32 %v1275, %v1387
      %1389 = vmatmul.f32.gmra.mxu0 %v319
      %v1390 = vpop.f32.mrf.mxu0
      %v1391 = vadd.f32 %v1278, %v1390
      %1392 = vmatmul.f32.gmra.mxu0 %v324
      %v1393 = vpop.f32.mrf.mxu0
      %v1394 = vadd.f32 %v1281, %v1393
      %1395 = vmatmul.f32.gmra.mxu0 %v329
      %v1396 = vpop.f32.mrf.mxu0
      %v1397 = vadd.f32 %v1284, %v1396
      %1398 = vmatmul.f32.gmra.mxu0 %v334
      %v1399 = vpop.f32.mrf.mxu0
      %v1400 = vadd.f32 %v1287, %v1399
      %1401 = vmatmul.f32.gmra.mxu0 %v339
      %v1402 = vpop.f32.mrf.mxu0
      %v1403 = vadd.f32 %v1290, %v1402
      %1404 = vmatmul.f32.gmra.mxu0 %v344
      %v1405 = vpop.f32.mrf.mxu0
      %v1406 = vadd.f32 %v1293, %v1405
      %1407 = vmatmul.f32.gmra.mxu0 %v349
      %v1408 = vpop.f32.mrf.mxu0
      %v1409 = vadd.f32 %v1296, %v1408
      %1410 = vmatmul.f32.gmra.mxu0 %v354
      %v1411 = vpop.f32.mrf.mxu0
      %v1412 = vadd.f32 %v1299, %v1411
      %1413 = vmatmul.f32.gmra.mxu0 %v359
      %v1414 = vpop.f32.mrf.mxu0
      %v1415 = vadd.f32 %v1302, %v1414
      %1416 = vmatmul.f32.gmra.mxu0 %v364
      %v1417 = vpop.f32.mrf.mxu0
      %v1418 = vadd.f32 %v1305, %v1417
      %1419 = vmatmul.f32.gmra.mxu0 %v369
      %v1420 = vpop.f32.mrf.mxu0
      %v1421 = vadd.f32 %v1308, %v1420
      %1422 = vmatmul.f32.gmra.mxu0 %v374
      %v1423 = vpop.f32.mrf.mxu0
      %v1424 = vadd.f32 %v1311, %v1423
      %1425 = vmatmul.f32.gmra.mxu0 %v379
      %v1426 = vpop.f32.mrf.mxu0
      %v1427 = vadd.f32 %v1314, %v1426
      %1428 = vmatmul.f32.gmra.mxu0 %v384
      %v1429 = vpop.f32.mrf.mxu0
      %v1430 = vadd.f32 %v1317, %v1429
      %1431 = vmatmul.f32.gmra.mxu0 %v389
      %v1432 = vpop.f32.mrf.mxu0
      %v1433 = vadd.f32 %v1320, %v1432
      %1434 = vmatmul.f32.gmra.mxu0 %v394
      %v1435 = vpop.f32.mrf.mxu0
      %v1436 = vadd.f32 %v1323, %v1435
      %1437 = vmatmul.f32.gmra.mxu0 %v399
      %v1438 = vpop.f32.mrf.mxu0
      %v1439 = vadd.f32 %v1326, %v1438
      %1440 = vmatmul.f32.gmra.mxu0 %v404
      %v1441 = vpop.f32.mrf.mxu0
      %v1442 = vadd.f32 %v1329, %v1441
      %1443 = vmatmul.f32.gmra.mxu0 %v409
      %v1444 = vpop.f32.mrf.mxu0
      %v1445 = vadd.f32 %v1332, %v1444
      %1446 = vmatmul.f32.gmra.mxu0 %v414
      %v1447 = vpop.f32.mrf.mxu0
      %v1448 = vadd.f32 %v1335, %v1447
      %1449 = vdwg.mxu0
      %1450 = vmatpush.msra.mxu0 %v513
      %1451 = vmatpush.msra.mxu0 %v511
      %1452 = vmatpush.msra.mxu0 %v509
      %1453 = vmatpush.msra.mxu0 %v507
      %1454 = vmatpush.msra.mxu0 %v505
      %1455 = vmatpush.msra.mxu0 %v503
      %1456 = vmatpush.msra.mxu0 %v501
      %1457 = vmatpush.msra.mxu0 %v499
      %1458 = vmatpush.msra.mxu0 %v497
      %1459 = vmatpush.msra.mxu0 %v495
      %1460 = vmatpush.msra.mxu0 %v493
      %1461 = vmatpush.msra.mxu0 %v491
      %1462 = vmatpush.msra.mxu0 %v489
      %1463 = vmatpush.msra.mxu0 %v487
      %1464 = vmatpush.msra.mxu0 %v485
      %1465 = vmatpush.msra.mxu0 %v483
      %1466 = vmatmul.f32.gmra.mxu0 %v260
      %v1467 = vpop.f32.mrf.mxu0
      %v1468 = vadd.f32 %v1355, %v1467
      %1469 = vmatmul.f32.gmra.mxu0 %v265
      %v1470 = vpop.f32.mrf.mxu0
      %v1471 = vadd.f32 %v1358, %v1470
      %1472 = vmatmul.f32.gmra.mxu0 %v270
      %v1473 = vpop.f32.mrf.mxu0
      %v1474 = vadd.f32 %v1361, %v1473
      %1475 = vmatmul.f32.gmra.mxu0 %v275
      %v1476 = vpop.f32.mrf.mxu0
      %v1477 = vadd.f32 %v1364, %v1476
      %1478 = vmatmul.f32.gmra.mxu0 %v280
      %v1479 = vpop.f32.mrf.mxu0
      %v1480 = vadd.f32 %v1367, %v1479
      %1481 = vmatmul.f32.gmra.mxu0 %v285
      %v1482 = vpop.f32.mrf.mxu0
      %v1483 = vadd.f32 %v1370, %v1482
      %1484 = vmatmul.f32.gmra.mxu0 %v290
      %v1485 = vpop.f32.mrf.mxu0
      %v1486 = vadd.f32 %v1373, %v1485
      %1487 = vmatmul.f32.gmra.mxu0 %v295
      %v1488 = vpop.f32.mrf.mxu0
      %v1489 = vadd.f32 %v1376, %v1488
      %1490 = vmatmul.f32.gmra.mxu0 %v300
      %v1491 = vpop.f32.mrf.mxu0
      %v1492 = vadd.f32 %v1379, %v1491
      %1493 = vmatmul.f32.gmra.mxu0 %v305
      %v1494 = vpop.f32.mrf.mxu0
      %v1495 = vadd.f32 %v1382, %v1494
      %1496 = vmatmul.f32.gmra.mxu0 %v310
      %v1497 = vpop.f32.mrf.mxu0
      %v1498 = vadd.f32 %v1385, %v1497
      %1499 = vmatmul.f32.gmra.mxu0 %v315
      %v1500 = vpop.f32.mrf.mxu0
      %v1501 = vadd.f32 %v1388, %v1500
      %1502 = vmatmul.f32.gmra.mxu0 %v320
      %v1503 = vpop.f32.mrf.mxu0
      %v1504 = vadd.f32 %v1391, %v1503
      %1505 = vmatmul.f32.gmra.mxu0 %v325
      %v1506 = vpop.f32.mrf.mxu0
      %v1507 = vadd.f32 %v1394, %v1506
      %1508 = vmatmul.f32.gmra.mxu0 %v330
      %v1509 = vpop.f32.mrf.mxu0
      %v1510 = vadd.f32 %v1397, %v1509
      %1511 = vmatmul.f32.gmra.mxu0 %v335
      %v1512 = vpop.f32.mrf.mxu0
      %v1513 = vadd.f32 %v1400, %v1512
      %1514 = vmatmul.f32.gmra.mxu0 %v340
      %v1515 = vpop.f32.mrf.mxu0
      %v1516 = vadd.f32 %v1403, %v1515
      %1517 = vmatmul.f32.gmra.mxu0 %v345
      %v1518 = vpop.f32.mrf.mxu0
      %v1519 = vadd.f32 %v1406, %v1518
      %1520 = vmatmul.f32.gmra.mxu0 %v350
      %v1521 = vpop.f32.mrf.mxu0
      %v1522 = vadd.f32 %v1409, %v1521
      %1523 = vmatmul.f32.gmra.mxu0 %v355
      %v1524 = vpop.f32.mrf.mxu0
      %v1525 = vadd.f32 %v1412, %v1524
      %1526 = vmatmul.f32.gmra.mxu0 %v360
      %v1527 = vpop.f32.mrf.mxu0
      %v1528 = vadd.f32 %v1415, %v1527
      %1529 = vmatmul.f32.gmra.mxu0 %v365
      %v1530 = vpop.f32.mrf.mxu0
      %v1531 = vadd.f32 %v1418, %v1530
      %1532 = vmatmul.f32.gmra.mxu0 %v370
      %v1533 = vpop.f32.mrf.mxu0
      %v1534 = vadd.f32 %v1421, %v1533
      %1535 = vmatmul.f32.gmra.mxu0 %v375
      %v1536 = vpop.f32.mrf.mxu0
      %v1537 = vadd.f32 %v1424, %v1536
      %1538 = vmatmul.f32.gmra.mxu0 %v380
      %v1539 = vpop.f32.mrf.mxu0
      %v1540 = vadd.f32 %v1427, %v1539
      %1541 = vmatmul.f32.gmra.mxu0 %v385
      %v1542 = vpop.f32.mrf.mxu0
      %v1543 = vadd.f32 %v1430, %v1542
      %1544 = vmatmul.f32.gmra.mxu0 %v390
      %v1545 = vpop.f32.mrf.mxu0
      %v1546 = vadd.f32 %v1433, %v1545
      %1547 = vmatmul.f32.gmra.mxu0 %v395
      %v1548 = vpop.f32.mrf.mxu0
      %v1549 = vadd.f32 %v1436, %v1548
      %1550 = vmatmul.f32.gmra.mxu0 %v400
      %v1551 = vpop.f32.mrf.mxu0
      %v1552 = vadd.f32 %v1439, %v1551
      %1553 = vmatmul.f32.gmra.mxu0 %v405
      %v1554 = vpop.f32.mrf.mxu0
      %v1555 = vadd.f32 %v1442, %v1554
      %1556 = vmatmul.f32.gmra.mxu0 %v410
      %v1557 = vpop.f32.mrf.mxu0
      %v1558 = vadd.f32 %v1445, %v1557
      %1559 = vmatmul.f32.gmra.mxu0 %v415
      %v1560 = vpop.f32.mrf.mxu0
      %v1561 = vadd.f32 %v1448, %v1560
      %1562 = vdwg.mxu0
      %1563 = vmatpush.msra.mxu0 %v545
      %1564 = vmatpush.msra.mxu0 %v543
      %1565 = vmatpush.msra.mxu0 %v541
      %1566 = vmatpush.msra.mxu0 %v539
      %1567 = vmatpush.msra.mxu0 %v537
      %1568 = vmatpush.msra.mxu0 %v535
      %1569 = vmatpush.msra.mxu0 %v533
      %1570 = vmatpush.msra.mxu0 %v531
      %1571 = vmatpush.msra.mxu0 %v529
      %1572 = vmatpush.msra.mxu0 %v527
      %1573 = vmatpush.msra.mxu0 %v525
      %1574 = vmatpush.msra.mxu0 %v523
      %1575 = vmatpush.msra.mxu0 %v521
      %1576 = vmatpush.msra.mxu0 %v519
      %1577 = vmatpush.msra.mxu0 %v517
      %1578 = vmatpush.msra.mxu0 %v515
      %1579 = vmatmul.f32.gmra.mxu0 %v261
      %v1580 = vpop.f32.mrf.mxu0
      %v1581 = vadd.f32 %v1468, %v1580
      %1582 = vmatmul.f32.gmra.mxu0 %v266
      %v1583 = vpop.f32.mrf.mxu0
      %v1584 = vadd.f32 %v1471, %v1583
      %1585 = vmatmul.f32.gmra.mxu0 %v271
      %v1586 = vpop.f32.mrf.mxu0
      %v1587 = vadd.f32 %v1474, %v1586
      %1588 = vmatmul.f32.gmra.mxu0 %v276
      %v1589 = vpop.f32.mrf.mxu0
      %v1590 = vadd.f32 %v1477, %v1589
      %1591 = vmatmul.f32.gmra.mxu0 %v281
      %v1592 = vpop.f32.mrf.mxu0
      %v1593 = vadd.f32 %v1480, %v1592
      %1594 = vmatmul.f32.gmra.mxu0 %v286
      %v1595 = vpop.f32.mrf.mxu0
      %v1596 = vadd.f32 %v1483, %v1595
      %1597 = vmatmul.f32.gmra.mxu0 %v291
      %v1598 = vpop.f32.mrf.mxu0
      %v1599 = vadd.f32 %v1486, %v1598
      %1600 = vmatmul.f32.gmra.mxu0 %v296
      %v1601 = vpop.f32.mrf.mxu0
      %v1602 = vadd.f32 %v1489, %v1601
      %1603 = vmatmul.f32.gmra.mxu0 %v301
      %v1604 = vpop.f32.mrf.mxu0
      %v1605 = vadd.f32 %v1492, %v1604
      %1606 = vmatmul.f32.gmra.mxu0 %v306
      %v1607 = vpop.f32.mrf.mxu0
      %v1608 = vadd.f32 %v1495, %v1607
      %1609 = vmatmul.f32.gmra.mxu0 %v311
      %v1610 = vpop.f32.mrf.mxu0
      %v1611 = vadd.f32 %v1498, %v1610
      %1612 = vmatmul.f32.gmra.mxu0 %v316
      %v1613 = vpop.f32.mrf.mxu0
      %v1614 = vadd.f32 %v1501, %v1613
      %1615 = vmatmul.f32.gmra.mxu0 %v321
      %v1616 = vpop.f32.mrf.mxu0
      %v1617 = vadd.f32 %v1504, %v1616
      %1618 = vmatmul.f32.gmra.mxu0 %v326
      %v1619 = vpop.f32.mrf.mxu0
      %v1620 = vadd.f32 %v1507, %v1619
      %1621 = vmatmul.f32.gmra.mxu0 %v331
      %v1622 = vpop.f32.mrf.mxu0
      %v1623 = vadd.f32 %v1510, %v1622
      %1624 = vmatmul.f32.gmra.mxu0 %v336
      %v1625 = vpop.f32.mrf.mxu0
      %v1626 = vadd.f32 %v1513, %v1625
      %1627 = vmatmul.f32.gmra.mxu0 %v341
      %v1628 = vpop.f32.mrf.mxu0
      %v1629 = vadd.f32 %v1516, %v1628
      %1630 = vmatmul.f32.gmra.mxu0 %v346
      %v1631 = vpop.f32.mrf.mxu0
      %v1632 = vadd.f32 %v1519, %v1631
      %1633 = vmatmul.f32.gmra.mxu0 %v351
      %v1634 = vpop.f32.mrf.mxu0
      %v1635 = vadd.f32 %v1522, %v1634
      %1636 = vmatmul.f32.gmra.mxu0 %v356
      %v1637 = vpop.f32.mrf.mxu0
      %v1638 = vadd.f32 %v1525, %v1637
      %1639 = vmatmul.f32.gmra.mxu0 %v361
      %v1640 = vpop.f32.mrf.mxu0
      %v1641 = vadd.f32 %v1528, %v1640
      %1642 = vmatmul.f32.gmra.mxu0 %v366
      %v1643 = vpop.f32.mrf.mxu0
      %v1644 = vadd.f32 %v1531, %v1643
      %1645 = vmatmul.f32.gmra.mxu0 %v371
      %v1646 = vpop.f32.mrf.mxu0
      %v1647 = vadd.f32 %v1534, %v1646
      %1648 = vmatmul.f32.gmra.mxu0 %v376
      %v1649 = vpop.f32.mrf.mxu0
      %v1650 = vadd.f32 %v1537, %v1649
      %1651 = vmatmul.f32.gmra.mxu0 %v381
      %v1652 = vpop.f32.mrf.mxu0
      %v1653 = vadd.f32 %v1540, %v1652
      %1654 = vmatmul.f32.gmra.mxu0 %v386
      %v1655 = vpop.f32.mrf.mxu0
      %v1656 = vadd.f32 %v1543, %v1655
      %1657 = vmatmul.f32.gmra.mxu0 %v391
      %v1658 = vpop.f32.mrf.mxu0
      %v1659 = vadd.f32 %v1546, %v1658
      %1660 = vmatmul.f32.gmra.mxu0 %v396
      %v1661 = vpop.f32.mrf.mxu0
      %v1662 = vadd.f32 %v1549, %v1661
      %1663 = vmatmul.f32.gmra.mxu0 %v401
      %v1664 = vpop.f32.mrf.mxu0
      %v1665 = vadd.f32 %v1552, %v1664
      %1666 = vmatmul.f32.gmra.mxu0 %v406
      %v1667 = vpop.f32.mrf.mxu0
      %v1668 = vadd.f32 %v1555, %v1667
      %1669 = vmatmul.f32.gmra.mxu0 %v411
      %v1670 = vpop.f32.mrf.mxu0
      %v1671 = vadd.f32 %v1558, %v1670
      %1672 = vmatmul.f32.gmra.mxu0 %v416
      %v1673 = vpop.f32.mrf.mxu0
      %v1674 = vadd.f32 %v1561, %v1673
      %1675 = vdwg.mxu0
      %1676 = vmatpush.msra.mxu0 0.0
      %1677 = vmatpush.msra.mxu0 0.0
      %1678 = vmatpush.msra.mxu0 0.0
      %1679 = vmatpush.msra.mxu0 0.0
      %1680 = vmatpush.msra.mxu0 0.0
      %1681 = vmatpush.msra.mxu0 0.0
      %1682 = vmatpush.msra.mxu0 0.0
      %1683 = vmatpush.msra.mxu0 0.0
      %1684 = vmatpush.msra.mxu0 %v561
      %1685 = vmatpush.msra.mxu0 %v559
      %1686 = vmatpush.msra.mxu0 %v557
      %1687 = vmatpush.msra.mxu0 %v555
      %1688 = vmatpush.msra.mxu0 %v553
      %1689 = vmatpush.msra.mxu0 %v551
      %1690 = vmatpush.msra.mxu0 %v549
      %1691 = vmatpush.msra.mxu0 %v547
      %1692 = vmatmul.f32.gmra.mxu0 %v564
      %v1693 = vpop.f32.mrf.mxu0
      %v1694 = vadd.f32 %v1581, %v1693
      %1695 = vmatmul.f32.gmra.mxu0 %v567
      %v1696 = vpop.f32.mrf.mxu0
      %v1697 = vadd.f32 %v1584, %v1696
      %1698 = vmatmul.f32.gmra.mxu0 %v570
      %v1699 = vpop.f32.mrf.mxu0
      %v1700 = vadd.f32 %v1587, %v1699
      %1701 = vmatmul.f32.gmra.mxu0 %v573
      %v1702 = vpop.f32.mrf.mxu0
      %v1703 = vadd.f32 %v1590, %v1702
      %1704 = vmatmul.f32.gmra.mxu0 %v576
      %v1705 = vpop.f32.mrf.mxu0
      %v1706 = vadd.f32 %v1593, %v1705
      %1707 = vmatmul.f32.gmra.mxu0 %v579
      %v1708 = vpop.f32.mrf.mxu0
      %v1709 = vadd.f32 %v1596, %v1708
      %1710 = vmatmul.f32.gmra.mxu0 %v582
      %v1711 = vpop.f32.mrf.mxu0
      %v1712 = vadd.f32 %v1599, %v1711
      %1713 = vmatmul.f32.gmra.mxu0 %v585
      %v1714 = vpop.f32.mrf.mxu0
      %v1715 = vadd.f32 %v1602, %v1714
      %1716 = vmatmul.f32.gmra.mxu0 %v588
      %v1717 = vpop.f32.mrf.mxu0
      %v1718 = vadd.f32 %v1605, %v1717
      %1719 = vmatmul.f32.gmra.mxu0 %v591
      %v1720 = vpop.f32.mrf.mxu0
      %v1721 = vadd.f32 %v1608, %v1720
      %1722 = vmatmul.f32.gmra.mxu0 %v594
      %v1723 = vpop.f32.mrf.mxu0
      %v1724 = vadd.f32 %v1611, %v1723
      %1725 = vmatmul.f32.gmra.mxu0 %v597
      %v1726 = vpop.f32.mrf.mxu0
      %v1727 = vadd.f32 %v1614, %v1726
      %1728 = vmatmul.f32.gmra.mxu0 %v600
      %v1729 = vpop.f32.mrf.mxu0
      %v1730 = vadd.f32 %v1617, %v1729
      %1731 = vmatmul.f32.gmra.mxu0 %v603
      %v1732 = vpop.f32.mrf.mxu0
      %v1733 = vadd.f32 %v1620, %v1732
      %1734 = vmatmul.f32.gmra.mxu0 %v606
      %v1735 = vpop.f32.mrf.mxu0
      %v1736 = vadd.f32 %v1623, %v1735
      %1737 = vmatmul.f32.gmra.mxu0 %v609
      %v1738 = vpop.f32.mrf.mxu0
      %v1739 = vadd.f32 %v1626, %v1738
      %1740 = vmatmul.f32.gmra.mxu0 %v612
      %v1741 = vpop.f32.mrf.mxu0
      %v1742 = vadd.f32 %v1629, %v1741
      %1743 = vmatmul.f32.gmra.mxu0 %v615
      %v1744 = vpop.f32.mrf.mxu0
      %v1745 = vadd.f32 %v1632, %v1744
      %1746 = vmatmul.f32.gmra.mxu0 %v618
      %v1747 = vpop.f32.mrf.mxu0
      %v1748 = vadd.f32 %v1635, %v1747
      %1749 = vmatmul.f32.gmra.mxu0 %v621
      %v1750 = vpop.f32.mrf.mxu0
      %v1751 = vadd.f32 %v1638, %v1750
      %1752 = vmatmul.f32.gmra.mxu0 %v624
      %v1753 = vpop.f32.mrf.mxu0
      %v1754 = vadd.f32 %v1641, %v1753
      %1755 = vmatmul.f32.gmra.mxu0 %v627
      %v1756 = vpop.f32.mrf.mxu0
      %v1757 = vadd.f32 %v1644, %v1756
      %1758 = vmatmul.f32.gmra.mxu0 %v630
      %v1759 = vpop.f32.mrf.mxu0
      %v1760 = vadd.f32 %v1647, %v1759
      %1761 = vmatmul.f32.gmra.mxu0 %v633
      %v1762 = vpop.f32.mrf.mxu0
      %v1763 = vadd.f32 %v1650, %v1762
      %1764 = vmatmul.f32.gmra.mxu0 %v636
      %v1765 = vpop.f32.mrf.mxu0
      %v1766 = vadd.f32 %v1653, %v1765
      %1767 = vmatmul.f32.gmra.mxu0 %v639
      %v1768 = vpop.f32.mrf.mxu0
      %v1769 = vadd.f32 %v1656, %v1768
      %1770 = vmatmul.f32.gmra.mxu0 %v642
      %v1771 = vpop.f32.mrf.mxu0
      %v1772 = vadd.f32 %v1659, %v1771
      %1773 = vmatmul.f32.gmra.mxu0 %v645
      %v1774 = vpop.f32.mrf.mxu0
      %v1775 = vadd.f32 %v1662, %v1774
      %1776 = vmatmul.f32.gmra.mxu0 %v648
      %v1777 = vpop.f32.mrf.mxu0
      %v1778 = vadd.f32 %v1665, %v1777
      %1779 = vmatmul.f32.gmra.mxu0 %v651
      %v1780 = vpop.f32.mrf.mxu0
      %v1781 = vadd.f32 %v1668, %v1780
      %1782 = vmatmul.f32.gmra.mxu0 %v654
      %v1783 = vpop.f32.mrf.mxu0
      %v1784 = vadd.f32 %v1671, %v1783
      %1785 = vmatmul.f32.gmra.mxu0 %v657
      %v1786 = vpop.f32.mrf.mxu0
      %v1787 = vadd.f32 %v1674, %v1786
      %1788 = vdwg.mxu0
      %v1789 = vld [vmem:[%s2] sm:$0x3]
      %v1791 = vperm.slane %v1789, 0
      %v1792 = vperm.slane %v1789, 1
      %v1795 = vmul.f32 %v1129, %v1791
      %v1796 = vmul.f32 %v1694, %v1792
      %v1797 = vmul.f32 %v1132, %v1791
      %v1798 = vmul.f32 %v1697, %v1792
      %v1799 = vmul.f32 %v1135, %v1791
      %v1800 = vmul.f32 %v1700, %v1792
      %v1801 = vmul.f32 %v1138, %v1791
      %v1802 = vmul.f32 %v1703, %v1792
      %v1803 = vmul.f32 %v1141, %v1791
      %v1804 = vmul.f32 %v1706, %v1792
      %v1805 = vmul.f32 %v1144, %v1791
      %v1806 = vmul.f32 %v1709, %v1792
      %v1807 = vmul.f32 %v1147, %v1791
      %v1808 = vmul.f32 %v1712, %v1792
      %v1809 = vmul.f32 %v1150, %v1791
      %v1810 = vmul.f32 %v1715, %v1792
      %v1811 = vmul.f32 %v1153, %v1791
      %v1812 = vmul.f32 %v1718, %v1792
      %v1813 = vmul.f32 %v1156, %v1791
      %v1814 = vmul.f32 %v1721, %v1792
      %v1815 = vmul.f32 %v1159, %v1791
      %v1816 = vmul.f32 %v1724, %v1792
      %v1817 = vmul.f32 %v1162, %v1791
      %v1818 = vmul.f32 %v1727, %v1792
      %v1819 = vmul.f32 %v1165, %v1791
      %v1820 = vmul.f32 %v1730, %v1792
      %v1821 = vmul.f32 %v1168, %v1791
      %v1822 = vmul.f32 %v1733, %v1792
      %v1823 = vmul.f32 %v1171, %v1791
      %v1824 = vmul.f32 %v1736, %v1792
      %v1825 = vmul.f32 %v1174, %v1791
      %v1826 = vmul.f32 %v1739, %v1792
      %v1827 = vmul.f32 %v1177, %v1791
      %v1828 = vmul.f32 %v1742, %v1792
      %v1829 = vmul.f32 %v1180, %v1791
      %v1830 = vmul.f32 %v1745, %v1792
      %v1831 = vmul.f32 %v1183, %v1791
      %v1832 = vmul.f32 %v1748, %v1792
      %v1833 = vmul.f32 %v1186, %v1791
      %v1834 = vmul.f32 %v1751, %v1792
      %v1835 = vmul.f32 %v1189, %v1791
      %v1836 = vmul.f32 %v1754, %v1792
      %v1837 = vmul.f32 %v1192, %v1791
      %v1838 = vmul.f32 %v1757, %v1792
      %v1839 = vmul.f32 %v1195, %v1791
      %v1840 = vmul.f32 %v1760, %v1792
      %v1841 = vmul.f32 %v1198, %v1791
      %v1842 = vmul.f32 %v1763, %v1792
      %v1843 = vmul.f32 %v1201, %v1791
      %v1844 = vmul.f32 %v1766, %v1792
      %v1845 = vmul.f32 %v1204, %v1791
      %v1846 = vmul.f32 %v1769, %v1792
      %v1847 = vmul.f32 %v1207, %v1791
      %v1848 = vmul.f32 %v1772, %v1792
      %v1849 = vmul.f32 %v1210, %v1791
      %v1850 = vmul.f32 %v1775, %v1792
      %v1851 = vmul.f32 %v1213, %v1791
      %v1852 = vmul.f32 %v1778, %v1792
      %v1853 = vmul.f32 %v1216, %v1791
      %v1854 = vmul.f32 %v1781, %v1792
      %v1855 = vmul.f32 %v1219, %v1791
      %v1856 = vmul.f32 %v1784, %v1792
      %v1857 = vmul.f32 %v1222, %v1791
      %v1858 = vmul.f32 %v1787, %v1792
      %v1859 = vld [vmem:[%s3] sm:$0x3]
      %v1861 = vperm.slane %v1859, 0
      %v1862 = vperm.slane %v1859, 1
      %v1865 = vadd.f32 %v1795, %v1861
      %v1866 = vadd.f32 %v1796, %v1862
      %v1867 = vadd.f32 %v1797, %v1861
      %v1868 = vadd.f32 %v1798, %v1862
      %v1869 = vadd.f32 %v1799, %v1861
      %v1870 = vadd.f32 %v1800, %v1862
      %v1871 = vadd.f32 %v1801, %v1861
      %v1872 = vadd.f32 %v1802, %v1862
      %v1873 = vadd.f32 %v1803, %v1861
      %v1874 = vadd.f32 %v1804, %v1862
      %v1875 = vadd.f32 %v1805, %v1861
      %v1876 = vadd.f32 %v1806, %v1862
      %v1877 = vadd.f32 %v1807, %v1861
      %v1878 = vadd.f32 %v1808, %v1862
      %v1879 = vadd.f32 %v1809, %v1861
      %v1880 = vadd.f32 %v1810, %v1862
      %v1881 = vadd.f32 %v1811, %v1861
      %v1882 = vadd.f32 %v1812, %v1862
      %v1883 = vadd.f32 %v1813, %v1861
      %v1884 = vadd.f32 %v1814, %v1862
      %v1885 = vadd.f32 %v1815, %v1861
      %v1886 = vadd.f32 %v1816, %v1862
      %v1887 = vadd.f32 %v1817, %v1861
      %v1888 = vadd.f32 %v1818, %v1862
      %v1889 = vadd.f32 %v1819, %v1861
      %v1890 = vadd.f32 %v1820, %v1862
      %v1891 = vadd.f32 %v1821, %v1861
      %v1892 = vadd.f32 %v1822, %v1862
      %v1893 = vadd.f32 %v1823, %v1861
      %v1894 = vadd.f32 %v1824, %v1862
      %v1895 = vadd.f32 %v1825, %v1861
      %v1896 = vadd.f32 %v1826, %v1862
      %v1897 = vadd.f32 %v1827, %v1861
      %v1898 = vadd.f32 %v1828, %v1862
      %v1899 = vadd.f32 %v1829, %v1861
      %v1900 = vadd.f32 %v1830, %v1862
      %v1901 = vadd.f32 %v1831, %v1861
      %v1902 = vadd.f32 %v1832, %v1862
      %v1903 = vadd.f32 %v1833, %v1861
      %v1904 = vadd.f32 %v1834, %v1862
      %v1905 = vadd.f32 %v1835, %v1861
      %v1906 = vadd.f32 %v1836, %v1862
      %v1907 = vadd.f32 %v1837, %v1861
      %v1908 = vadd.f32 %v1838, %v1862
      %v1909 = vadd.f32 %v1839, %v1861
      %v1910 = vadd.f32 %v1840, %v1862
      %v1911 = vadd.f32 %v1841, %v1861
      %v1912 = vadd.f32 %v1842, %v1862
      %v1913 = vadd.f32 %v1843, %v1861
      %v1914 = vadd.f32 %v1844, %v1862
      %v1915 = vadd.f32 %v1845, %v1861
      %v1916 = vadd.f32 %v1846, %v1862
      %v1917 = vadd.f32 %v1847, %v1861
      %v1918 = vadd.f32 %v1848, %v1862
      %v1919 = vadd.f32 %v1849, %v1861
      %v1920 = vadd.f32 %v1850, %v1862
      %v1921 = vadd.f32 %v1851, %v1861
      %v1922 = vadd.f32 %v1852, %v1862
      %v1923 = vadd.f32 %v1853, %v1861
      %v1924 = vadd.f32 %v1854, %v1862
      %v1925 = vadd.f32 %v1855, %v1861
      %v1926 = vadd.f32 %v1856, %v1862
      %v1927 = vadd.f32 %v1857, %v1861
      %v1928 = vadd.f32 %v1858, %v1862
      %v1929 = vmax.f32 %v1865, 0.0
      %v1930 = vmax.f32 %v1866, 0.0
      %v1931 = vmax.f32 %v1867, 0.0
      %v1932 = vmax.f32 %v1868, 0.0
      %v1933 = vmax.f32 %v1869, 0.0
      %v1934 = vmax.f32 %v1870, 0.0
      %v1935 = vmax.f32 %v1871, 0.0
      %v1936 = vmax.f32 %v1872, 0.0
      %v1937 = vmax.f32 %v1873, 0.0
      %v1938 = vmax.f32 %v1874, 0.0
      %v1939 = vmax.f32 %v1875, 0.0
      %v1940 = vmax.f32 %v1876, 0.0
      %v1941 = vmax.f32 %v1877, 0.0
      %v1942 = vmax.f32 %v1878, 0.0
      %v1943 = vmax.f32 %v1879, 0.0
      %v1944 = vmax.f32 %v1880, 0.0
      %v1945 = vmax.f32 %v1881, 0.0
      %v1946 = vmax.f32 %v1882, 0.0
      %v1947 = vmax.f32 %v1883, 0.0
      %v1948 = vmax.f32 %v1884, 0.0
      %v1949 = vmax.f32 %v1885, 0.0
      %v1950 = vmax.f32 %v1886, 0.0
      %v1951 = vmax.f32 %v1887, 0.0
      %v1952 = vmax.f32 %v1888, 0.0
      %v1953 = vmax.f32 %v1889, 0.0
      %v1954 = vmax.f32 %v1890, 0.0
      %v1955 = vmax.f32 %v1891, 0.0
      %v1956 = vmax.f32 %v1892, 0.0
      %v1957 = vmax.f32 %v1893, 0.0
      %v1958 = vmax.f32 %v1894, 0.0
      %v1959 = vmax.f32 %v1895, 0.0
      %v1960 = vmax.f32 %v1896, 0.0
      %v1961 = vmax.f32 %v1897, 0.0
      %v1962 = vmax.f32 %v1898, 0.0
      %v1963 = vmax.f32 %v1899, 0.0
      %v1964 = vmax.f32 %v1900, 0.0
      %v1965 = vmax.f32 %v1901, 0.0
      %v1966 = vmax.f32 %v1902, 0.0
      %v1967 = vmax.f32 %v1903, 0.0
      %v1968 = vmax.f32 %v1904, 0.0
      %v1969 = vmax.f32 %v1905, 0.0
      %v1970 = vmax.f32 %v1906, 0.0
      %v1971 = vmax.f32 %v1907, 0.0
      %v1972 = vmax.f32 %v1908, 0.0
      %v1973 = vmax.f32 %v1909, 0.0
      %v1974 = vmax.f32 %v1910, 0.0
      %v1975 = vmax.f32 %v1911, 0.0
      %v1976 = vmax.f32 %v1912, 0.0
      %v1977 = vmax.f32 %v1913, 0.0
      %v1978 = vmax.f32 %v1914, 0.0
      %v1979 = vmax.f32 %v1915, 0.0
      %v1980 = vmax.f32 %v1916, 0.0
      %v1981 = vmax.f32 %v1917, 0.0
      %v1982 = vmax.f32 %v1918, 0.0
      %v1983 = vmax.f32 %v1919, 0.0
      %v1984 = vmax.f32 %v1920, 0.0
      %v1985 = vmax.f32 %v1921, 0.0
      %v1986 = vmax.f32 %v1922, 0.0
      %v1987 = vmax.f32 %v1923, 0.0
      %v1988 = vmax.f32 %v1924, 0.0
      %v1989 = vmax.f32 %v1925, 0.0
      %v1990 = vmax.f32 %v1926, 0.0
      %v1991 = vmax.f32 %v1927, 0.0
      %v1992 = vmax.f32 %v1928, 0.0
      %v1993 = vld [vmem:[%s4] sm:$0xff]
      %v1994 = vld [vmem:[%s4 + $0x8] sm:$0xff]
      %v1995 = vld [vmem:[%s4 + $0x10] sm:$0xff]
      %v1996 = vld [vmem:[%s4 + $0x18] sm:$0xff]
      %v1997 = vld [vmem:[%s4 + $0x20] sm:$0xff]
      %v1998 = vld [vmem:[%s4 + $0x28] sm:$0xff]
      %v1999 = vld [vmem:[%s4 + $0x30] sm:$0xff]
      %v2000 = vld [vmem:[%s4 + $0x38] sm:$0xff]
      %v2001 = vld [vmem:[%s4 + $0x40] sm:$0xff]
      %v2002 = vld [vmem:[%s4 + $0x48] sm:$0xff]
      %v2003 = vld [vmem:[%s4 + $0x50] sm:$0xff]
      %v2004 = vld [vmem:[%s4 + $0x58] sm:$0xff]
      %v2005 = vld [vmem:[%s4 + $0x60] sm:$0xff]
      %v2006 = vld [vmem:[%s4 + $0x68] sm:$0xff]
      %v2007 = vld [vmem:[%s4 + $0x70] sm:$0xff]
      %v2008 = vld [vmem:[%s4 + $0x78] sm:$0xff]
      %v2009 = vld [vmem:[%s4 + $0x80] sm:$0xff]
      %v2010 = vld [vmem:[%s4 + $0x88] sm:$0xff]
      %v2011 = vld [vmem:[%s4 + $0x90] sm:$0xff]
      %v2012 = vld [vmem:[%s4 + $0x98] sm:$0xff]
      %v2013 = vld [vmem:[%s4 + $0xa0] sm:$0xff]
      %v2014 = vld [vmem:[%s4 + $0xa8] sm:$0xff]
      %v2015 = vld [vmem:[%s4 + $0xb0] sm:$0xff]
      %v2016 = vld [vmem:[%s4 + $0xb8] sm:$0xff]
      %v2017 = vld [vmem:[%s5] sm:$0x1]
      %v2019 = vperm.slane %v2017, 0
      %v2022 = vsel %vm562, %v1930, 0
      %v2025 = vsel %vm562, %v1932, 0
      %v2028 = vsel %vm562, %v1934, 0
      %v2031 = vsel %vm562, %v1936, 0
      %v2034 = vsel %vm562, %v1938, 0
      %v2037 = vsel %vm562, %v1940, 0
      %v2040 = vsel %vm562, %v1942, 0
      %v2043 = vsel %vm562, %v1944, 0
      %v2046 = vsel %vm562, %v1946, 0
      %v2049 = vsel %vm562, %v1948, 0
      %v2052 = vsel %vm562, %v1950, 0
      %v2055 = vsel %vm562, %v1952, 0
      %v2058 = vsel %vm562, %v1954, 0
      %v2061 = vsel %vm562, %v1956, 0
      %v2064 = vsel %vm562, %v1958, 0
      %v2067 = vsel %vm562, %v1960, 0
      %v2070 = vsel %vm562, %v1962, 0
      %v2073 = vsel %vm562, %v1964, 0
      %v2076 = vsel %vm562, %v1966, 0
      %v2079 = vsel %vm562, %v1968, 0
      %v2082 = vsel %vm562, %v1970, 0
      %v2085 = vsel %vm562, %v1972, 0
      %v2088 = vsel %vm562, %v1974, 0
      %v2091 = vsel %vm562, %v1976, 0
      %v2094 = vsel %vm562, %v1978, 0
      %v2097 = vsel %vm562, %v1980, 0
      %v2100 = vsel %vm562, %v1982, 0
      %v2103 = vsel %vm562, %v1984, 0
      %v2106 = vsel %vm562, %v1986, 0
      %v2109 = vsel %vm562, %v1988, 0
      %v2112 = vsel %vm562, %v1990, 0
      %v2115 = vsel %vm562, %v1992, 0
      %2117 = vmatpush.msra.mxu0 %v2008
      %2118 = vmatpush.msra.mxu0 %v2007
      %2119 = vmatpush.msra.mxu0 %v2006
      %2120 = vmatpush.msra.mxu0 %v2005
      %2121 = vmatpush.msra.mxu0 %v2004
      %2122 = vmatpush.msra.mxu0 %v2003
      %2123 = vmatpush.msra.mxu0 %v2002
      %2124 = vmatpush.msra.mxu0 %v2001
      %2125 = vmatpush.msra.mxu0 %v2000
      %2126 = vmatpush.msra.mxu0 %v1999
      %2127 = vmatpush.msra.mxu0 %v1998
      %2128 = vmatpush.msra.mxu0 %v1997
      %2129 = vmatpush.msra.mxu0 %v1996
      %2130 = vmatpush.msra.mxu0 %v1995
      %2131 = vmatpush.msra.mxu0 %v1994
      %2132 = vmatpush.msra.mxu0 %v1993
      %2133 = vmatmul.f32.gmra.mxu0 %v1929
      %v2134 = vpop.f32.mrf.mxu0
      %v2135 = vadd.f32 %v2019, %v2134
      %2136 = vmatmul.f32.gmra.mxu0 %v1931
      %v2137 = vpop.f32.mrf.mxu0
      %v2138 = vadd.f32 %v2019, %v2137
      %2139 = vmatmul.f32.gmra.mxu0 %v1933
      %v2140 = vpop.f32.mrf.mxu0
      %v2141 = vadd.f32 %v2019, %v2140
      %2142 = vmatmul.f32.gmra.mxu0 %v1935
      %v2143 = vpop.f32.mrf.mxu0
      %v2144 = vadd.f32 %v2019, %v2143
      %2145 = vmatmul.f32.gmra.mxu0 %v1937
      %v2146 = vpop.f32.mrf.mxu0
      %v2147 = vadd.f32 %v2019, %v2146
      %2148 = vmatmul.f32.gmra.mxu0 %v1939
      %v2149 = vpop.f32.mrf.mxu0
      %v2150 = vadd.f32 %v2019, %v2149
      %2151 = vmatmul.f32.gmra.mxu0 %v1941
      %v2152 = vpop.f32.mrf.mxu0
      %v2153 = vadd.f32 %v2019, %v2152
      %2154 = vmatmul.f32.gmra.mxu0 %v1943
      %v2155 = vpop.f32.mrf.mxu0
      %v2156 = vadd.f32 %v2019, %v2155
      %2157 = vmatmul.f32.gmra.mxu0 %v1945
      %v2158 = vpop.f32.mrf.mxu0
      %v2159 = vadd.f32 %v2019, %v2158
      %2160 = vmatmul.f32.gmra.mxu0 %v1947
      %v2161 = vpop.f32.mrf.mxu0
      %v2162 = vadd.f32 %v2019, %v2161
      %2163 = vmatmul.f32.gmra.mxu0 %v1949
      %v2164 = vpop.f32.mrf.mxu0
      %v2165 = vadd.f32 %v2019, %v2164
      %2166 = vmatmul.f32.gmra.mxu0 %v1951
      %v2167 = vpop.f32.mrf.mxu0
      %v2168 = vadd.f32 %v2019, %v2167
      %2169 = vmatmul.f32.gmra.mxu0 %v1953
      %v2170 = vpop.f32.mrf.mxu0
      %v2171 = vadd.f32 %v2019, %v2170
      %2172 = vmatmul.f32.gmra.mxu0 %v1955
      %v2173 = vpop.f32.mrf.mxu0
      %v2174 = vadd.f32 %v2019, %v2173
      %2175 = vmatmul.f32.gmra.mxu0 %v1957
      %v2176 = vpop.f32.mrf.mxu0
      %v2177 = vadd.f32 %v2019, %v2176
      %2178 = vmatmul.f32.gmra.mxu0 %v1959
      %v2179 = vpop.f32.mrf.mxu0
      %v2180 = vadd.f32 %v2019, %v2179
      %2181 = vmatmul.f32.gmra.mxu0 %v1961
      %v2182 = vpop.f32.mrf.mxu0
      %v2183 = vadd.f32 %v2019, %v2182
      %2184 = vmatmul.f32.gmra.mxu0 %v1963
      %v2185 = vpop.f32.mrf.mxu0
      %v2186 = vadd.f32 %v2019, %v2185
      %2187 = vmatmul.f32.gmra.mxu0 %v1965
      %v2188 = vpop.f32.mrf.mxu0
      %v2189 = vadd.f32 %v2019, %v2188
      %2190 = vmatmul.f32.gmra.mxu0 %v1967
      %v2191 = vpop.f32.mrf.mxu0
      %v2192 = vadd.f32 %v2019, %v2191
      %2193 = vmatmul.f32.gmra.mxu0 %v1969
      %v2194 = vpop.f32.mrf.mxu0
      %v2195 = vadd.f32 %v2019, %v2194
      %2196 = vmatmul.f32.gmra.mxu0 %v1971
      %v2197 = vpop.f32.mrf.mxu0
      %v2198 = vadd.f32 %v2019, %v2197
      %2199 = vmatmul.f32.gmra.mxu0 %v1973
      %v2200 = vpop.f32.mrf.mxu0
      %v2201 = vadd.f32 %v2019, %v2200
      %2202 = vmatmul.f32.gmra.mxu0 %v1975
      %v2203 = vpop.f32.mrf.mxu0
      %v2204 = vadd.f32 %v2019, %v2203
      %2205 = vmatmul.f32.gmra.mxu0 %v1977
      %v2206 = vpop.f32.mrf.mxu0
      %v2207 = vadd.f32 %v2019, %v2206
      %2208 = vmatmul.f32.gmra.mxu0 %v1979
      %v2209 = vpop.f32.mrf.mxu0
      %v2210 = vadd.f32 %v2019, %v2209
      %2211 = vmatmul.f32.gmra.mxu0 %v1981
      %v2212 = vpop.f32.mrf.mxu0
      %v2213 = vadd.f32 %v2019, %v2212
      %2214 = vmatmul.f32.gmra.mxu0 %v1983
      %v2215 = vpop.f32.mrf.mxu0
      %v2216 = vadd.f32 %v2019, %v2215
      %2217 = vmatmul.f32.gmra.mxu0 %v1985
      %v2218 = vpop.f32.mrf.mxu0
      %v2219 = vadd.f32 %v2019, %v2218
      %2220 = vmatmul.f32.gmra.mxu0 %v1987
      %v2221 = vpop.f32.mrf.mxu0
      %v2222 = vadd.f32 %v2019, %v2221
      %2223 = vmatmul.f32.gmra.mxu0 %v1989
      %v2224 = vpop.f32.mrf.mxu0
      %v2225 = vadd.f32 %v2019, %v2224
      %2226 = vmatmul.f32.gmra.mxu0 %v1991
      %v2227 = vpop.f32.mrf.mxu0
      %v2228 = vadd.f32 %v2019, %v2227
      %2229 = vdwg.mxu0
      %2230 = vmatpush.msra.mxu0 0.0
      %2231 = vmatpush.msra.mxu0 0.0
      %2232 = vmatpush.msra.mxu0 0.0
      %2233 = vmatpush.msra.mxu0 0.0
      %2234 = vmatpush.msra.mxu0 0.0
      %2235 = vmatpush.msra.mxu0 0.0
      %2236 = vmatpush.msra.mxu0 0.0
      %2237 = vmatpush.msra.mxu0 0.0
      %2238 = vmatpush.msra.mxu0 %v2016
      %2239 = vmatpush.msra.mxu0 %v2015
      %2240 = vmatpush.msra.mxu0 %v2014
      %2241 = vmatpush.msra.mxu0 %v2013
      %2242 = vmatpush.msra.mxu0 %v2012
      %2243 = vmatpush.msra.mxu0 %v2011
      %2244 = vmatpush.msra.mxu0 %v2010
      %2245 = vmatpush.msra.mxu0 %v2009
      %2246 = vmatmul.f32.gmra.mxu0 %v2022
      %v2247 = vpop.f32.mrf.mxu0
      %v2248 = vadd.f32 %v2135, %v2247
      %2249 = vmatmul.f32.gmra.mxu0 %v2025
      %v2250 = vpop.f32.mrf.mxu0
      %v2251 = vadd.f32 %v2138, %v2250
      %2252 = vmatmul.f32.gmra.mxu0 %v2028
      %v2253 = vpop.f32.mrf.mxu0
      %v2254 = vadd.f32 %v2141, %v2253
      %2255 = vmatmul.f32.gmra.mxu0 %v2031
      %v2256 = vpop.f32.mrf.mxu0
      %v2257 = vadd.f32 %v2144, %v2256
      %2258 = vmatmul.f32.gmra.mxu0 %v2034
      %v2259 = vpop.f32.mrf.mxu0
      %v2260 = vadd.f32 %v2147, %v2259
      %2261 = vmatmul.f32.gmra.mxu0 %v2037
      %v2262 = vpop.f32.mrf.mxu0
      %v2263 = vadd.f32 %v2150, %v2262
      %2264 = vmatmul.f32.gmra.mxu0 %v2040
      %v2265 = vpop.f32.mrf.mxu0
      %v2266 = vadd.f32 %v2153, %v2265
      %2267 = vmatmul.f32.gmra.mxu0 %v2043
      %v2268 = vpop.f32.mrf.mxu0
      %v2269 = vadd.f32 %v2156, %v2268
      %2270 = vmatmul.f32.gmra.mxu0 %v2046
      %v2271 = vpop.f32.mrf.mxu0
      %v2272 = vadd.f32 %v2159, %v2271
      %2273 = vmatmul.f32.gmra.mxu0 %v2049
      %v2274 = vpop.f32.mrf.mxu0
      %v2275 = vadd.f32 %v2162, %v2274
      %2276 = vmatmul.f32.gmra.mxu0 %v2052
      %v2277 = vpop.f32.mrf.mxu0
      %v2278 = vadd.f32 %v2165, %v2277
      %2279 = vmatmul.f32.gmra.mxu0 %v2055
      %v2280 = vpop.f32.mrf.mxu0
      %v2281 = vadd.f32 %v2168, %v2280
      %2282 = vmatmul.f32.gmra.mxu0 %v2058
      %v2283 = vpop.f32.mrf.mxu0
      %v2284 = vadd.f32 %v2171, %v2283
      %2285 = vmatmul.f32.gmra.mxu0 %v2061
      %v2286 = vpop.f32.mrf.mxu0
      %v2287 = vadd.f32 %v2174, %v2286
      %2288 = vmatmul.f32.gmra.mxu0 %v2064
      %v2289 = vpop.f32.mrf.mxu0
      %v2290 = vadd.f32 %v2177, %v2289
      %2291 = vmatmul.f32.gmra.mxu0 %v2067
      %v2292 = vpop.f32.mrf.mxu0
      %v2293 = vadd.f32 %v2180, %v2292
      %2294 = vmatmul.f32.gmra.mxu0 %v2070
      %v2295 = vpop.f32.mrf.mxu0
      %v2296 = vadd.f32 %v2183, %v2295
      %2297 = vmatmul.f32.gmra.mxu0 %v2073
      %v2298 = vpop.f32.mrf.mxu0
      %v2299 = vadd.f32 %v2186, %v2298
      %2300 = vmatmul.f32.gmra.mxu0 %v2076
      %v2301 = vpop.f32.mrf.mxu0
      %v2302 = vadd.f32 %v2189, %v2301
      %2303 = vmatmul.f32.gmra.mxu0 %v2079
      %v2304 = vpop.f32.mrf.mxu0
      %v2305 = vadd.f32 %v2192, %v2304
      %2306 = vmatmul.f32.gmra.mxu0 %v2082
      %v2307 = vpop.f32.mrf.mxu0
      %v2308 = vadd.f32 %v2195, %v2307
      %2309 = vmatmul.f32.gmra.mxu0 %v2085
      %v2310 = vpop.f32.mrf.mxu0
      %v2311 = vadd.f32 %v2198, %v2310
      %2312 = vmatmul.f32.gmra.mxu0 %v2088
      %v2313 = vpop.f32.mrf.mxu0
      %v2314 = vadd.f32 %v2201, %v2313
      %2315 = vmatmul.f32.gmra.mxu0 %v2091
      %v2316 = vpop.f32.mrf.mxu0
      %v2317 = vadd.f32 %v2204, %v2316
      %2318 = vmatmul.f32.gmra.mxu0 %v2094
      %v2319 = vpop.f32.mrf.mxu0
      %v2320 = vadd.f32 %v2207, %v2319
      %2321 = vmatmul.f32.gmra.mxu0 %v2097
      %v2322 = vpop.f32.mrf.mxu0
      %v2323 = vadd.f32 %v2210, %v2322
      %2324 = vmatmul.f32.gmra.mxu0 %v2100
      %v2325 = vpop.f32.mrf.mxu0
      %v2326 = vadd.f32 %v2213, %v2325
      %2327 = vmatmul.f32.gmra.mxu0 %v2103
      %v2328 = vpop.f32.mrf.mxu0
      %v2329 = vadd.f32 %v2216, %v2328
      %2330 = vmatmul.f32.gmra.mxu0 %v2106
      %v2331 = vpop.f32.mrf.mxu0
      %v2332 = vadd.f32 %v2219, %v2331
      %2333 = vmatmul.f32.gmra.mxu0 %v2109
      %v2334 = vpop.f32.mrf.mxu0
      %v2335 = vadd.f32 %v2222, %v2334
      %2336 = vmatmul.f32.gmra.mxu0 %v2112
      %v2337 = vpop.f32.mrf.mxu0
      %v2338 = vadd.f32 %v2225, %v2337
      %2339 = vmatmul.f32.gmra.mxu0 %v2115
      %v2340 = vpop.f32.mrf.mxu0
      %v2341 = vadd.f32 %v2228, %v2340
      %2342 = vdwg.mxu0
      %v2343 = vlaneseq
      %v2344 = vand.u32 %v2343, 127
      %vm2345 = vcmp.lt.s32.totalorder %v2344, 80
      %v2346 = vxor.u32 %v2248, 2147483648
      %v2347 = vxor.u32 %v2251, 2147483648
      %v2348 = vxor.u32 %v2254, 2147483648
      %v2349 = vxor.u32 %v2257, 2147483648
      %v2350 = vxor.u32 %v2260, 2147483648
      %v2351 = vxor.u32 %v2263, 2147483648
      %v2352 = vxor.u32 %v2266, 2147483648
      %v2353 = vxor.u32 %v2269, 2147483648
      %v2354 = vxor.u32 %v2272, 2147483648
      %v2355 = vxor.u32 %v2275, 2147483648
      %v2356 = vxor.u32 %v2278, 2147483648
      %v2357 = vxor.u32 %v2281, 2147483648
      %v2358 = vxor.u32 %v2284, 2147483648
      %v2359 = vxor.u32 %v2287, 2147483648
      %v2360 = vxor.u32 %v2290, 2147483648
      %v2361 = vxor.u32 %v2293, 2147483648
      %v2362 = vxor.u32 %v2296, 2147483648
      %v2363 = vxor.u32 %v2299, 2147483648
      %v2364 = vxor.u32 %v2302, 2147483648
      %v2365 = vxor.u32 %v2305, 2147483648
      %v2366 = vxor.u32 %v2308, 2147483648
      %v2367 = vxor.u32 %v2311, 2147483648
      %v2368 = vxor.u32 %v2314, 2147483648
      %v2369 = vxor.u32 %v2317, 2147483648
      %v2370 = vxor.u32 %v2320, 2147483648
      %v2371 = vxor.u32 %v2323, 2147483648
      %v2372 = vxor.u32 %v2326, 2147483648
      %v2373 = vxor.u32 %v2329, 2147483648
      %v2374 = vxor.u32 %v2332, 2147483648
      %v2375 = vxor.u32 %v2335, 2147483648
      %v2376 = vxor.u32 %v2338, 2147483648
      %v2377 = vxor.u32 %v2341, 2147483648
      %v2378 = vmul.f32 %v2346, 1.442695
      %v2379 = vpow.pop %v2378
      %v2380 = vmul.f32 %v2347, 1.442695
      %v2381 = vpow.pop %v2380
      %v2382 = vmul.f32 %v2348, 1.442695
      %v2383 = vpow.pop %v2382
      %v2384 = vmul.f32 %v2349, 1.442695
      %v2385 = vpow.pop %v2384
      %v2386 = vmul.f32 %v2350, 1.442695
      %v2387 = vpow.pop %v2386
      %v2388 = vmul.f32 %v2351, 1.442695
      %v2389 = vpow.pop %v2388
      %v2390 = vmul.f32 %v2352, 1.442695
      %v2391 = vpow.pop %v2390
      %v2392 = vmul.f32 %v2353, 1.442695
      %v2393 = vpow.pop %v2392
      %v2394 = vmul.f32 %v2354, 1.442695
      %v2395 = vpow.pop %v2394
      %v2396 = vmul.f32 %v2355, 1.442695
      %v2397 = vpow.pop %v2396
      %v2398 = vmul.f32 %v2356, 1.442695
      %v2399 = vpow.pop %v2398
      %v2400 = vmul.f32 %v2357, 1.442695
      %v2401 = vpow.pop %v2400
      %v2402 = vmul.f32 %v2358, 1.442695
      %v2403 = vpow.pop %v2402
      %v2404 = vmul.f32 %v2359, 1.442695
      %v2405 = vpow.pop %v2404
      %v2406 = vmul.f32 %v2360, 1.442695
      %v2407 = vpow.pop %v2406
      %v2408 = vmul.f32 %v2361, 1.442695
      %v2409 = vpow.pop %v2408
      %v2410 = vmul.f32 %v2362, 1.442695
      %v2411 = vpow.pop %v2410
      %v2412 = vmul.f32 %v2363, 1.442695
      %v2413 = vpow.pop %v2412
      %v2414 = vmul.f32 %v2364, 1.442695
      %v2415 = vpow.pop %v2414
      %v2416 = vmul.f32 %v2365, 1.442695
      %v2417 = vpow.pop %v2416
      %v2418 = vmul.f32 %v2366, 1.442695
      %v2419 = vpow.pop %v2418
      %v2420 = vmul.f32 %v2367, 1.442695
      %v2421 = vpow.pop %v2420
      %v2422 = vmul.f32 %v2368, 1.442695
      %v2423 = vpow.pop %v2422
      %v2424 = vmul.f32 %v2369, 1.442695
      %v2425 = vpow.pop %v2424
      %v2426 = vmul.f32 %v2370, 1.442695
      %v2427 = vpow.pop %v2426
      %v2428 = vmul.f32 %v2371, 1.442695
      %v2429 = vpow.pop %v2428
      %v2430 = vmul.f32 %v2372, 1.442695
      %v2431 = vpow.pop %v2430
      %v2432 = vmul.f32 %v2373, 1.442695
      %v2433 = vpow.pop %v2432
      %v2434 = vmul.f32 %v2374, 1.442695
      %v2435 = vpow.pop %v2434
      %v2436 = vmul.f32 %v2375, 1.442695
      %v2437 = vpow.pop %v2436
      %v2438 = vmul.f32 %v2376, 1.442695
      %v2439 = vpow.pop %v2438
      %v2440 = vmul.f32 %v2377, 1.442695
      %v2441 = vpow.pop %v2440
      %v2442 = vadd.f32 %v2379, 1.0
      %v2443 = vadd.f32 %v2381, 1.0
      %v2444 = vadd.f32 %v2383, 1.0
      %v2445 = vadd.f32 %v2385, 1.0
      %v2446 = vadd.f32 %v2387, 1.0
      %v2447 = vadd.f32 %v2389, 1.0
      %v2448 = vadd.f32 %v2391, 1.0
      %v2449 = vadd.f32 %v2393, 1.0
      %v2450 = vadd.f32 %v2395, 1.0
      %v2451 = vadd.f32 %v2397, 1.0
      %v2452 = vadd.f32 %v2399, 1.0
      %v2453 = vadd.f32 %v2401, 1.0
      %v2454 = vadd.f32 %v2403, 1.0
      %v2455 = vadd.f32 %v2405, 1.0
      %v2456 = vadd.f32 %v2407, 1.0
      %v2457 = vadd.f32 %v2409, 1.0
      %v2458 = vadd.f32 %v2411, 1.0
      %v2459 = vadd.f32 %v2413, 1.0
      %v2460 = vadd.f32 %v2415, 1.0
      %v2461 = vadd.f32 %v2417, 1.0
      %v2462 = vadd.f32 %v2419, 1.0
      %v2463 = vadd.f32 %v2421, 1.0
      %v2464 = vadd.f32 %v2423, 1.0
      %v2465 = vadd.f32 %v2425, 1.0
      %v2466 = vadd.f32 %v2427, 1.0
      %v2467 = vadd.f32 %v2429, 1.0
      %v2468 = vadd.f32 %v2431, 1.0
      %v2469 = vadd.f32 %v2433, 1.0
      %v2470 = vadd.f32 %v2435, 1.0
      %v2471 = vadd.f32 %v2437, 1.0
      %v2472 = vadd.f32 %v2439, 1.0
      %v2473 = vadd.f32 %v2441, 1.0
      %v2474 = vrcp.pop %v2442
      %v2475 = vmul.f32 %v2442, %v2474
      %v2476 = vsub.f32 1.0, %v2475
      %v2477 = vmul.f32 %v2474, %v2476
      %v2478 = vadd.f32 %v2474, %v2477
      %vm2479 = vweird.f32 %v2442
      %vm2480 = vweird.f32 %v2474
      %vm2481 = vmor %vm2479, %vm2480
      %v2482 = vsel %vm2481, %v2474, %v2478
      %v2483 = vand.u32 2147483647, %v2442
      %vm2484 = vcmp.eq.f32.partialorder %v2483, 8.507059e+37
      %v2485 = vand.u32 %v2442, 2147483648
      %v2486 = vor.u32 1.1754944e-38, %v2485
      %v2487 = vsel %vm2484, %v2486, %v2482
      %v2488 = vmul.f32 1.0, %v2487
      %v2489 = vrcp.pop %v2443
      %v2490 = vmul.f32 %v2443, %v2489
      %v2491 = vsub.f32 1.0, %v2490
      %v2492 = vmul.f32 %v2489, %v2491
      %v2493 = vadd.f32 %v2489, %v2492
      %vm2494 = vweird.f32 %v2443
      %vm2495 = vweird.f32 %v2489
      %vm2496 = vmor %vm2494, %vm2495
      %v2497 = vsel %vm2496, %v2489, %v2493
      %v2498 = vand.u32 2147483647, %v2443
      %vm2499 = vcmp.eq.f32.partialorder %v2498, 8.507059e+37
      %v2500 = vand.u32 %v2443, 2147483648
      %v2501 = vor.u32 1.1754944e-38, %v2500
      %v2502 = vsel %vm2499, %v2501, %v2497
      %v2503 = vmul.f32 1.0, %v2502
      %v2504 = vrcp.pop %v2444
      %v2505 = vmul.f32 %v2444, %v2504
      %v2506 = vsub.f32 1.0, %v2505
      %v2507 = vmul.f32 %v2504, %v2506
      %v2508 = vadd.f32 %v2504, %v2507
      %vm2509 = vweird.f32 %v2444
      %vm2510 = vweird.f32 %v2504
      %vm2511 = vmor %vm2509, %vm2510
      %v2512 = vsel %vm2511, %v2504, %v2508
      %v2513 = vand.u32 2147483647, %v2444
      %vm2514 = vcmp.eq.f32.partialorder %v2513, 8.507059e+37
      %v2515 = vand.u32 %v2444, 2147483648
      %v2516 = vor.u32 1.1754944e-38, %v2515
      %v2517 = vsel %vm2514, %v2516, %v2512
      %v2518 = vmul.f32 1.0, %v2517
      %v2519 = vrcp.pop %v2445
      %v2520 = vmul.f32 %v2445, %v2519
      %v2521 = vsub.f32 1.0, %v2520
      %v2522 = vmul.f32 %v2519, %v2521
      %v2523 = vadd.f32 %v2519, %v2522
      %vm2524 = vweird.f32 %v2445
      %vm2525 = vweird.f32 %v2519
      %vm2526 = vmor %vm2524, %vm2525
      %v2527 = vsel %vm2526, %v2519, %v2523
      %v2528 = vand.u32 2147483647, %v2445
      %vm2529 = vcmp.eq.f32.partialorder %v2528, 8.507059e+37
      %v2530 = vand.u32 %v2445, 2147483648
      %v2531 = vor.u32 1.1754944e-38, %v2530
      %v2532 = vsel %vm2529, %v2531, %v2527
      %v2533 = vmul.f32 1.0, %v2532
      %v2534 = vrcp.pop %v2446
      %v2535 = vmul.f32 %v2446, %v2534
      %v2536 = vsub.f32 1.0, %v2535
      %v2537 = vmul.f32 %v2534, %v2536
      %v2538 = vadd.f32 %v2534, %v2537
      %vm2539 = vweird.f32 %v2446
      %vm2540 = vweird.f32 %v2534
      %vm2541 = vmor %vm2539, %vm2540
      %v2542 = vsel %vm2541, %v2534, %v2538
      %v2543 = vand.u32 2147483647, %v2446
      %vm2544 = vcmp.eq.f32.partialorder %v2543, 8.507059e+37
      %v2545 = vand.u32 %v2446, 2147483648
      %v2546 = vor.u32 1.1754944e-38, %v2545
      %v2547 = vsel %vm2544, %v2546, %v2542
      %v2548 = vmul.f32 1.0, %v2547
      %v2549 = vrcp.pop %v2447
      %v2550 = vmul.f32 %v2447, %v2549
      %v2551 = vsub.f32 1.0, %v2550
      %v2552 = vmul.f32 %v2549, %v2551
      %v2553 = vadd.f32 %v2549, %v2552
      %vm2554 = vweird.f32 %v2447
      %vm2555 = vweird.f32 %v2549
      %vm2556 = vmor %vm2554, %vm2555
      %v2557 = vsel %vm2556, %v2549, %v2553
      %v2558 = vand.u32 2147483647, %v2447
      %vm2559 = vcmp.eq.f32.partialorder %v2558, 8.507059e+37
      %v2560 = vand.u32 %v2447, 2147483648
      %v2561 = vor.u32 1.1754944e-38, %v2560
      %v2562 = vsel %vm2559, %v2561, %v2557
      %v2563 = vmul.f32 1.0, %v2562
      %v2564 = vrcp.pop %v2448
      %v2565 = vmul.f32 %v2448, %v2564
      %v2566 = vsub.f32 1.0, %v2565
      %v2567 = vmul.f32 %v2564, %v2566
      %v2568 = vadd.f32 %v2564, %v2567
      %vm2569 = vweird.f32 %v2448
      %vm2570 = vweird.f32 %v2564
      %vm2571 = vmor %vm2569, %vm2570
      %v2572 = vsel %vm2571, %v2564, %v2568
      %v2573 = vand.u32 2147483647, %v2448
      %vm2574 = vcmp.eq.f32.partialorder %v2573, 8.507059e+37
      %v2575 = vand.u32 %v2448, 2147483648
      %v2576 = vor.u32 1.1754944e-38, %v2575
      %v2577 = vsel %vm2574, %v2576, %v2572
      %v2578 = vmul.f32 1.0, %v2577
      %v2579 = vrcp.pop %v2449
      %v2580 = vmul.f32 %v2449, %v2579
      %v2581 = vsub.f32 1.0, %v2580
      %v2582 = vmul.f32 %v2579, %v2581
      %v2583 = vadd.f32 %v2579, %v2582
      %vm2584 = vweird.f32 %v2449
      %vm2585 = vweird.f32 %v2579
      %vm2586 = vmor %vm2584, %vm2585
      %v2587 = vsel %vm2586, %v2579, %v2583
      %v2588 = vand.u32 2147483647, %v2449
      %vm2589 = vcmp.eq.f32.partialorder %v2588, 8.507059e+37
      %v2590 = vand.u32 %v2449, 2147483648
      %v2591 = vor.u32 1.1754944e-38, %v2590
      %v2592 = vsel %vm2589, %v2591, %v2587
      %v2593 = vmul.f32 1.0, %v2592
      %v2594 = vrcp.pop %v2450
      %v2595 = vmul.f32 %v2450, %v2594
      %v2596 = vsub.f32 1.0, %v2595
      %v2597 = vmul.f32 %v2594, %v2596
      %v2598 = vadd.f32 %v2594, %v2597
      %vm2599 = vweird.f32 %v2450
      %vm2600 = vweird.f32 %v2594
      %vm2601 = vmor %vm2599, %vm2600
      %v2602 = vsel %vm2601, %v2594, %v2598
      %v2603 = vand.u32 2147483647, %v2450
      %vm2604 = vcmp.eq.f32.partialorder %v2603, 8.507059e+37
      %v2605 = vand.u32 %v2450, 2147483648
      %v2606 = vor.u32 1.1754944e-38, %v2605
      %v2607 = vsel %vm2604, %v2606, %v2602
      %v2608 = vmul.f32 1.0, %v2607
      %v2609 = vrcp.pop %v2451
      %v2610 = vmul.f32 %v2451, %v2609
      %v2611 = vsub.f32 1.0, %v2610
      %v2612 = vmul.f32 %v2609, %v2611
      %v2613 = vadd.f32 %v2609, %v2612
      %vm2614 = vweird.f32 %v2451
      %vm2615 = vweird.f32 %v2609
      %vm2616 = vmor %vm2614, %vm2615
      %v2617 = vsel %vm2616, %v2609, %v2613
      %v2618 = vand.u32 2147483647, %v2451
      %vm2619 = vcmp.eq.f32.partialorder %v2618, 8.507059e+37
      %v2620 = vand.u32 %v2451, 2147483648
      %v2621 = vor.u32 1.1754944e-38, %v2620
      %v2622 = vsel %vm2619, %v2621, %v2617
      %v2623 = vmul.f32 1.0, %v2622
      %v2624 = vrcp.pop %v2452
      %v2625 = vmul.f32 %v2452, %v2624
      %v2626 = vsub.f32 1.0, %v2625
      %v2627 = vmul.f32 %v2624, %v2626
      %v2628 = vadd.f32 %v2624, %v2627
      %vm2629 = vweird.f32 %v2452
      %vm2630 = vweird.f32 %v2624
      %vm2631 = vmor %vm2629, %vm2630
      %v2632 = vsel %vm2631, %v2624, %v2628
      %v2633 = vand.u32 2147483647, %v2452
      %vm2634 = vcmp.eq.f32.partialorder %v2633, 8.507059e+37
      %v2635 = vand.u32 %v2452, 2147483648
      %v2636 = vor.u32 1.1754944e-38, %v2635
      %v2637 = vsel %vm2634, %v2636, %v2632
      %v2638 = vmul.f32 1.0, %v2637
      %v2639 = vrcp.pop %v2453
      %v2640 = vmul.f32 %v2453, %v2639
      %v2641 = vsub.f32 1.0, %v2640
      %v2642 = vmul.f32 %v2639, %v2641
      %v2643 = vadd.f32 %v2639, %v2642
      %vm2644 = vweird.f32 %v2453
      %vm2645 = vweird.f32 %v2639
      %vm2646 = vmor %vm2644, %vm2645
      %v2647 = vsel %vm2646, %v2639, %v2643
      %v2648 = vand.u32 2147483647, %v2453
      %vm2649 = vcmp.eq.f32.partialorder %v2648, 8.507059e+37
      %v2650 = vand.u32 %v2453, 2147483648
      %v2651 = vor.u32 1.1754944e-38, %v2650
      %v2652 = vsel %vm2649, %v2651, %v2647
      %v2653 = vmul.f32 1.0, %v2652
      %v2654 = vrcp.pop %v2454
      %v2655 = vmul.f32 %v2454, %v2654
      %v2656 = vsub.f32 1.0, %v2655
      %v2657 = vmul.f32 %v2654, %v2656
      %v2658 = vadd.f32 %v2654, %v2657
      %vm2659 = vweird.f32 %v2454
      %vm2660 = vweird.f32 %v2654
      %vm2661 = vmor %vm2659, %vm2660
      %v2662 = vsel %vm2661, %v2654, %v2658
      %v2663 = vand.u32 2147483647, %v2454
      %vm2664 = vcmp.eq.f32.partialorder %v2663, 8.507059e+37
      %v2665 = vand.u32 %v2454, 2147483648
      %v2666 = vor.u32 1.1754944e-38, %v2665
      %v2667 = vsel %vm2664, %v2666, %v2662
      %v2668 = vmul.f32 1.0, %v2667
      %v2669 = vrcp.pop %v2455
      %v2670 = vmul.f32 %v2455, %v2669
      %v2671 = vsub.f32 1.0, %v2670
      %v2672 = vmul.f32 %v2669, %v2671
      %v2673 = vadd.f32 %v2669, %v2672
      %vm2674 = vweird.f32 %v2455
      %vm2675 = vweird.f32 %v2669
      %vm2676 = vmor %vm2674, %vm2675
      %v2677 = vsel %vm2676, %v2669, %v2673
      %v2678 = vand.u32 2147483647, %v2455
      %vm2679 = vcmp.eq.f32.partialorder %v2678, 8.507059e+37
      %v2680 = vand.u32 %v2455, 2147483648
      %v2681 = vor.u32 1.1754944e-38, %v2680
      %v2682 = vsel %vm2679, %v2681, %v2677
      %v2683 = vmul.f32 1.0, %v2682
      %v2684 = vrcp.pop %v2456
      %v2685 = vmul.f32 %v2456, %v2684
      %v2686 = vsub.f32 1.0, %v2685
      %v2687 = vmul.f32 %v2684, %v2686
      %v2688 = vadd.f32 %v2684, %v2687
      %vm2689 = vweird.f32 %v2456
      %vm2690 = vweird.f32 %v2684
      %vm2691 = vmor %vm2689, %vm2690
      %v2692 = vsel %vm2691, %v2684, %v2688
      %v2693 = vand.u32 2147483647, %v2456
      %vm2694 = vcmp.eq.f32.partialorder %v2693, 8.507059e+37
      %v2695 = vand.u32 %v2456, 2147483648
      %v2696 = vor.u32 1.1754944e-38, %v2695
      %v2697 = vsel %vm2694, %v2696, %v2692
      %v2698 = vmul.f32 1.0, %v2697
      %v2699 = vrcp.pop %v2457
      %v2700 = vmul.f32 %v2457, %v2699
      %v2701 = vsub.f32 1.0, %v2700
      %v2702 = vmul.f32 %v2699, %v2701
      %v2703 = vadd.f32 %v2699, %v2702
      %vm2704 = vweird.f32 %v2457
      %vm2705 = vweird.f32 %v2699
      %vm2706 = vmor %vm2704, %vm2705
      %v2707 = vsel %vm2706, %v2699, %v2703
      %v2708 = vand.u32 2147483647, %v2457
      %vm2709 = vcmp.eq.f32.partialorder %v2708, 8.507059e+37
      %v2710 = vand.u32 %v2457, 2147483648
      %v2711 = vor.u32 1.1754944e-38, %v2710
      %v2712 = vsel %vm2709, %v2711, %v2707
      %v2713 = vmul.f32 1.0, %v2712
      %v2714 = vrcp.pop %v2458
      %v2715 = vmul.f32 %v2458, %v2714
      %v2716 = vsub.f32 1.0, %v2715
      %v2717 = vmul.f32 %v2714, %v2716
      %v2718 = vadd.f32 %v2714, %v2717
      %vm2719 = vweird.f32 %v2458
      %vm2720 = vweird.f32 %v2714
      %vm2721 = vmor %vm2719, %vm2720
      %v2722 = vsel %vm2721, %v2714, %v2718
      %v2723 = vand.u32 2147483647, %v2458
      %vm2724 = vcmp.eq.f32.partialorder %v2723, 8.507059e+37
      %v2725 = vand.u32 %v2458, 2147483648
      %v2726 = vor.u32 1.1754944e-38, %v2725
      %v2727 = vsel %vm2724, %v2726, %v2722
      %v2728 = vmul.f32 1.0, %v2727
      %v2729 = vrcp.pop %v2459
      %v2730 = vmul.f32 %v2459, %v2729
      %v2731 = vsub.f32 1.0, %v2730
      %v2732 = vmul.f32 %v2729, %v2731
      %v2733 = vadd.f32 %v2729, %v2732
      %vm2734 = vweird.f32 %v2459
      %vm2735 = vweird.f32 %v2729
      %vm2736 = vmor %vm2734, %vm2735
      %v2737 = vsel %vm2736, %v2729, %v2733
      %v2738 = vand.u32 2147483647, %v2459
      %vm2739 = vcmp.eq.f32.partialorder %v2738, 8.507059e+37
      %v2740 = vand.u32 %v2459, 2147483648
      %v2741 = vor.u32 1.1754944e-38, %v2740
      %v2742 = vsel %vm2739, %v2741, %v2737
      %v2743 = vmul.f32 1.0, %v2742
      %v2744 = vrcp.pop %v2460
      %v2745 = vmul.f32 %v2460, %v2744
      %v2746 = vsub.f32 1.0, %v2745
      %v2747 = vmul.f32 %v2744, %v2746
      %v2748 = vadd.f32 %v2744, %v2747
      %vm2749 = vweird.f32 %v2460
      %vm2750 = vweird.f32 %v2744
      %vm2751 = vmor %vm2749, %vm2750
      %v2752 = vsel %vm2751, %v2744, %v2748
      %v2753 = vand.u32 2147483647, %v2460
      %vm2754 = vcmp.eq.f32.partialorder %v2753, 8.507059e+37
      %v2755 = vand.u32 %v2460, 2147483648
      %v2756 = vor.u32 1.1754944e-38, %v2755
      %v2757 = vsel %vm2754, %v2756, %v2752
      %v2758 = vmul.f32 1.0, %v2757
      %v2759 = vrcp.pop %v2461
      %v2760 = vmul.f32 %v2461, %v2759
      %v2761 = vsub.f32 1.0, %v2760
      %v2762 = vmul.f32 %v2759, %v2761
      %v2763 = vadd.f32 %v2759, %v2762
      %vm2764 = vweird.f32 %v2461
      %vm2765 = vweird.f32 %v2759
      %vm2766 = vmor %vm2764, %vm2765
      %v2767 = vsel %vm2766, %v2759, %v2763
      %v2768 = vand.u32 2147483647, %v2461
      %vm2769 = vcmp.eq.f32.partialorder %v2768, 8.507059e+37
      %v2770 = vand.u32 %v2461, 2147483648
      %v2771 = vor.u32 1.1754944e-38, %v2770
      %v2772 = vsel %vm2769, %v2771, %v2767
      %v2773 = vmul.f32 1.0, %v2772
      %v2774 = vrcp.pop %v2462
      %v2775 = vmul.f32 %v2462, %v2774
      %v2776 = vsub.f32 1.0, %v2775
      %v2777 = vmul.f32 %v2774, %v2776
      %v2778 = vadd.f32 %v2774, %v2777
      %vm2779 = vweird.f32 %v2462
      %vm2780 = vweird.f32 %v2774
      %vm2781 = vmor %vm2779, %vm2780
      %v2782 = vsel %vm2781, %v2774, %v2778
      %v2783 = vand.u32 2147483647, %v2462
      %vm2784 = vcmp.eq.f32.partialorder %v2783, 8.507059e+37
      %v2785 = vand.u32 %v2462, 2147483648
      %v2786 = vor.u32 1.1754944e-38, %v2785
      %v2787 = vsel %vm2784, %v2786, %v2782
      %v2788 = vmul.f32 1.0, %v2787
      %v2789 = vrcp.pop %v2463
      %v2790 = vmul.f32 %v2463, %v2789
      %v2791 = vsub.f32 1.0, %v2790
      %v2792 = vmul.f32 %v2789, %v2791
      %v2793 = vadd.f32 %v2789, %v2792
      %vm2794 = vweird.f32 %v2463
      %vm2795 = vweird.f32 %v2789
      %vm2796 = vmor %vm2794, %vm2795
      %v2797 = vsel %vm2796, %v2789, %v2793
      %v2798 = vand.u32 2147483647, %v2463
      %vm2799 = vcmp.eq.f32.partialorder %v2798, 8.507059e+37
      %v2800 = vand.u32 %v2463, 2147483648
      %v2801 = vor.u32 1.1754944e-38, %v2800
      %v2802 = vsel %vm2799, %v2801, %v2797
      %v2803 = vmul.f32 1.0, %v2802
      %v2804 = vrcp.pop %v2464
      %v2805 = vmul.f32 %v2464, %v2804
      %v2806 = vsub.f32 1.0, %v2805
      %v2807 = vmul.f32 %v2804, %v2806
      %v2808 = vadd.f32 %v2804, %v2807
      %vm2809 = vweird.f32 %v2464
      %vm2810 = vweird.f32 %v2804
      %vm2811 = vmor %vm2809, %vm2810
      %v2812 = vsel %vm2811, %v2804, %v2808
      %v2813 = vand.u32 2147483647, %v2464
      %vm2814 = vcmp.eq.f32.partialorder %v2813, 8.507059e+37
      %v2815 = vand.u32 %v2464, 2147483648
      %v2816 = vor.u32 1.1754944e-38, %v2815
      %v2817 = vsel %vm2814, %v2816, %v2812
      %v2818 = vmul.f32 1.0, %v2817
      %v2819 = vrcp.pop %v2465
      %v2820 = vmul.f32 %v2465, %v2819
      %v2821 = vsub.f32 1.0, %v2820
      %v2822 = vmul.f32 %v2819, %v2821
      %v2823 = vadd.f32 %v2819, %v2822
      %vm2824 = vweird.f32 %v2465
      %vm2825 = vweird.f32 %v2819
      %vm2826 = vmor %vm2824, %vm2825
      %v2827 = vsel %vm2826, %v2819, %v2823
      %v2828 = vand.u32 2147483647, %v2465
      %vm2829 = vcmp.eq.f32.partialorder %v2828, 8.507059e+37
      %v2830 = vand.u32 %v2465, 2147483648
      %v2831 = vor.u32 1.1754944e-38, %v2830
      %v2832 = vsel %vm2829, %v2831, %v2827
      %v2833 = vmul.f32 1.0, %v2832
      %v2834 = vrcp.pop %v2466
      %v2835 = vmul.f32 %v2466, %v2834
      %v2836 = vsub.f32 1.0, %v2835
      %v2837 = vmul.f32 %v2834, %v2836
      %v2838 = vadd.f32 %v2834, %v2837
      %vm2839 = vweird.f32 %v2466
      %vm2840 = vweird.f32 %v2834
      %vm2841 = vmor %vm2839, %vm2840
      %v2842 = vsel %vm2841, %v2834, %v2838
      %v2843 = vand.u32 2147483647, %v2466
      %vm2844 = vcmp.eq.f32.partialorder %v2843, 8.507059e+37
      %v2845 = vand.u32 %v2466, 2147483648
      %v2846 = vor.u32 1.1754944e-38, %v2845
      %v2847 = vsel %vm2844, %v2846, %v2842
      %v2848 = vmul.f32 1.0, %v2847
      %v2849 = vrcp.pop %v2467
      %v2850 = vmul.f32 %v2467, %v2849
      %v2851 = vsub.f32 1.0, %v2850
      %v2852 = vmul.f32 %v2849, %v2851
      %v2853 = vadd.f32 %v2849, %v2852
      %vm2854 = vweird.f32 %v2467
      %vm2855 = vweird.f32 %v2849
      %vm2856 = vmor %vm2854, %vm2855
      %v2857 = vsel %vm2856, %v2849, %v2853
      %v2858 = vand.u32 2147483647, %v2467
      %vm2859 = vcmp.eq.f32.partialorder %v2858, 8.507059e+37
      %v2860 = vand.u32 %v2467, 2147483648
      %v2861 = vor.u32 1.1754944e-38, %v2860
      %v2862 = vsel %vm2859, %v2861, %v2857
      %v2863 = vmul.f32 1.0, %v2862
      %v2864 = vrcp.pop %v2468
      %v2865 = vmul.f32 %v2468, %v2864
      %v2866 = vsub.f32 1.0, %v2865
      %v2867 = vmul.f32 %v2864, %v2866
      %v2868 = vadd.f32 %v2864, %v2867
      %vm2869 = vweird.f32 %v2468
      %vm2870 = vweird.f32 %v2864
      %vm2871 = vmor %vm2869, %vm2870
      %v2872 = vsel %vm2871, %v2864, %v2868
      %v2873 = vand.u32 2147483647, %v2468
      %vm2874 = vcmp.eq.f32.partialorder %v2873, 8.507059e+37
      %v2875 = vand.u32 %v2468, 2147483648
      %v2876 = vor.u32 1.1754944e-38, %v2875
      %v2877 = vsel %vm2874, %v2876, %v2872
      %v2878 = vmul.f32 1.0, %v2877
      %v2879 = vrcp.pop %v2469
      %v2880 = vmul.f32 %v2469, %v2879
      %v2881 = vsub.f32 1.0, %v2880
      %v2882 = vmul.f32 %v2879, %v2881
      %v2883 = vadd.f32 %v2879, %v2882
      %vm2884 = vweird.f32 %v2469
      %vm2885 = vweird.f32 %v2879
      %vm2886 = vmor %vm2884, %vm2885
      %v2887 = vsel %vm2886, %v2879, %v2883
      %v2888 = vand.u32 2147483647, %v2469
      %vm2889 = vcmp.eq.f32.partialorder %v2888, 8.507059e+37
      %v2890 = vand.u32 %v2469, 2147483648
      %v2891 = vor.u32 1.1754944e-38, %v2890
      %v2892 = vsel %vm2889, %v2891, %v2887
      %v2893 = vmul.f32 1.0, %v2892
      %v2894 = vrcp.pop %v2470
      %v2895 = vmul.f32 %v2470, %v2894
      %v2896 = vsub.f32 1.0, %v2895
      %v2897 = vmul.f32 %v2894, %v2896
      %v2898 = vadd.f32 %v2894, %v2897
      %vm2899 = vweird.f32 %v2470
      %vm2900 = vweird.f32 %v2894
      %vm2901 = vmor %vm2899, %vm2900
      %v2902 = vsel %vm2901, %v2894, %v2898
      %v2903 = vand.u32 2147483647, %v2470
      %vm2904 = vcmp.eq.f32.partialorder %v2903, 8.507059e+37
      %v2905 = vand.u32 %v2470, 2147483648
      %v2906 = vor.u32 1.1754944e-38, %v2905
      %v2907 = vsel %vm2904, %v2906, %v2902
      %v2908 = vmul.f32 1.0, %v2907
      %v2909 = vrcp.pop %v2471
      %v2910 = vmul.f32 %v2471, %v2909
      %v2911 = vsub.f32 1.0, %v2910
      %v2912 = vmul.f32 %v2909, %v2911
      %v2913 = vadd.f32 %v2909, %v2912
      %vm2914 = vweird.f32 %v2471
      %vm2915 = vweird.f32 %v2909
      %vm2916 = vmor %vm2914, %vm2915
      %v2917 = vsel %vm2916, %v2909, %v2913
      %v2918 = vand.u32 2147483647, %v2471
      %vm2919 = vcmp.eq.f32.partialorder %v2918, 8.507059e+37
      %v2920 = vand.u32 %v2471, 2147483648
      %v2921 = vor.u32 1.1754944e-38, %v2920
      %v2922 = vsel %vm2919, %v2921, %v2917
      %v2923 = vmul.f32 1.0, %v2922
      %v2924 = vrcp.pop %v2472
      %v2925 = vmul.f32 %v2472, %v2924
      %v2926 = vsub.f32 1.0, %v2925
      %v2927 = vmul.f32 %v2924, %v2926
      %v2928 = vadd.f32 %v2924, %v2927
      %vm2929 = vweird.f32 %v2472
      %vm2930 = vweird.f32 %v2924
      %vm2931 = vmor %vm2929, %vm2930
      %v2932 = vsel %vm2931, %v2924, %v2928
      %v2933 = vand.u32 2147483647, %v2472
      %vm2934 = vcmp.eq.f32.partialorder %v2933, 8.507059e+37
      %v2935 = vand.u32 %v2472, 2147483648
      %v2936 = vor.u32 1.1754944e-38, %v2935
      %v2937 = vsel %vm2934, %v2936, %v2932
      %v2938 = vmul.f32 1.0, %v2937
      %v2939 = vrcp.pop %v2473
      %v2940 = vmul.f32 %v2473, %v2939
      %v2941 = vsub.f32 1.0, %v2940
      %v2942 = vmul.f32 %v2939, %v2941
      %v2943 = vadd.f32 %v2939, %v2942
      %vm2944 = vweird.f32 %v2473
      %vm2945 = vweird.f32 %v2939
      %vm2946 = vmor %vm2944, %vm2945
      %v2947 = vsel %vm2946, %v2939, %v2943
      %v2948 = vand.u32 2147483647, %v2473
      %vm2949 = vcmp.eq.f32.partialorder %v2948, 8.507059e+37
      %v2950 = vand.u32 %v2473, 2147483648
      %v2951 = vor.u32 1.1754944e-38, %v2950
      %v2952 = vsel %vm2949, %v2951, %v2947
      %v2953 = vmul.f32 1.0, %v2952
      %v2954 = vsel %vm2345, %v2488, %v2248
      %v2955 = vsel %vm2345, %v2503, %v2251
      %v2956 = vsel %vm2345, %v2518, %v2254
      %v2957 = vsel %vm2345, %v2533, %v2257
      %v2958 = vsel %vm2345, %v2548, %v2260
      %v2959 = vsel %vm2345, %v2563, %v2263
      %v2960 = vsel %vm2345, %v2578, %v2266
      %v2961 = vsel %vm2345, %v2593, %v2269
      %v2962 = vsel %vm2345, %v2608, %v2272
      %v2963 = vsel %vm2345, %v2623, %v2275
      %v2964 = vsel %vm2345, %v2638, %v2278
      %v2965 = vsel %vm2345, %v2653, %v2281
      %v2966 = vsel %vm2345, %v2668, %v2284
      %v2967 = vsel %vm2345, %v2683, %v2287
      %v2968 = vsel %vm2345, %v2698, %v2290
      %v2969 = vsel %vm2345, %v2713, %v2293
      %v2970 = vsel %vm2345, %v2728, %v2296
      %v2971 = vsel %vm2345, %v2743, %v2299
      %v2972 = vsel %vm2345, %v2758, %v2302
      %v2973 = vsel %vm2345, %v2773, %v2305
      %v2974 = vsel %vm2345, %v2788, %v2308
      %v2975 = vsel %vm2345, %v2803, %v2311
      %v2976 = vsel %vm2345, %v2818, %v2314
      %v2977 = vsel %vm2345, %v2833, %v2317
      %v2978 = vsel %vm2345, %v2848, %v2320
      %v2979 = vsel %vm2345, %v2863, %v2323
      %v2980 = vsel %vm2345, %v2878, %v2326
      %v2981 = vsel %vm2345, %v2893, %v2329
      %v2982 = vsel %vm2345, %v2908, %v2332
      %v2983 = vsel %vm2345, %v2923, %v2335
      %v2984 = vsel %vm2345, %v2938, %v2338
      %v2985 = vsel %vm2345, %v2953, %v2341
      %2986 = vst [vmem:[%s256] sm:$0xff] %v2954
      %2987 = vst [vmem:[%s256 + $0x8] sm:$0xff] %v2955
      %2988 = vst [vmem:[%s256 + $0x10] sm:$0xff] %v2956
      %2989 = vst [vmem:[%s256 + $0x18] sm:$0xff] %v2957
      %2990 = vst [vmem:[%s256 + $0x20] sm:$0xff] %v2958
      %2991 = vst [vmem:[%s256 + $0x28] sm:$0xff] %v2959
      %2992 = vst [vmem:[%s256 + $0x30] sm:$0xff] %v2960
      %2993 = vst [vmem:[%s256 + $0x38] sm:$0xff] %v2961
      %2994 = vst [vmem:[%s256 + $0x40] sm:$0xff] %v2962
      %2995 = vst [vmem:[%s256 + $0x48] sm:$0xff] %v2963
      %2996 = vst [vmem:[%s256 + $0x50] sm:$0xff] %v2964
      %2997 = vst [vmem:[%s256 + $0x58] sm:$0xff] %v2965
      %2998 = vst [vmem:[%s256 + $0x60] sm:$0xff] %v2966
      %2999 = vst [vmem:[%s256 + $0x68] sm:$0xff] %v2967
      %3000 = vst [vmem:[%s256 + $0x70] sm:$0xff] %v2968
      %3001 = vst [vmem:[%s256 + $0x78] sm:$0xff] %v2969
      %3002 = vst [vmem:[%s256 + $0x80] sm:$0xff] %v2970
      %3003 = vst [vmem:[%s256 + $0x88] sm:$0xff] %v2971
      %3004 = vst [vmem:[%s256 + $0x90] sm:$0xff] %v2972
      %3005 = vst [vmem:[%s256 + $0x98] sm:$0xff] %v2973
      %3006 = vst [vmem:[%s256 + $0xa0] sm:$0xff] %v2974
      %3007 = vst [vmem:[%s256 + $0xa8] sm:$0xff] %v2975
      %3008 = vst [vmem:[%s256 + $0xb0] sm:$0xff] %v2976
      %3009 = vst [vmem:[%s256 + $0xb8] sm:$0xff] %v2977
      %3010 = vst [vmem:[%s256 + $0xc0] sm:$0xff] %v2978
      %3011 = vst [vmem:[%s256 + $0xc8] sm:$0xff] %v2979
      %3012 = vst [vmem:[%s256 + $0xd0] sm:$0xff] %v2980
      %3013 = vst [vmem:[%s256 + $0xd8] sm:$0xff] %v2981
      %3014 = vst [vmem:[%s256 + $0xe0] sm:$0xff] %v2982
      %3015 = vst [vmem:[%s256 + $0xe8] sm:$0xff] %v2983
      %3016 = vst [vmem:[%s256 + $0xf0] sm:$0xff] %v2984
      %3017 = vst [vmem:[%s256 + $0xf8] sm:$0xff] %v2985
      %s3018 = smul.u32 32, %s17
      %p3019 = scmp.lt.s32.totalorder %s3018, 63
      %s3020 = scalar_select %p3019, %s3018, 63
      %s3021 = smul.addr %s3020, 8
      %s3022 = scalar_lea.vmem %s6, %s3021
      // Predicated region
      $region45: #{resnet50_head_forward.1} parent=43 // pred_check
        %p3023 = pneg %p166
      $region46: #{resnet50_head_forward.1} parent=43 // pred_check_branch
        %3025 = sbr.rel (%p3023) target = $region48
      $region47: #{resnet50_head_forward.1} parent=43 // pred_region
        %s3026 = smul.u32 32, %s17
      $region48: #{resnet50_head_forward.1} parent=43 // pred_fallthru
        _
    $region44: #{resnet50_head_forward.1} parent=5 // pred_fallthru
      _
    %p3027 = scmp.le.s32.totalorder 2, %s12
    // Predicated region
    $region49: #{resnet50_head_forward.1} parent=5 // pred_check
      %p3028 = pneg %p3027
    $region50: #{resnet50_head_forward.1} parent=5 // pred_check_branch
      %3030 = sbr.rel (%p3028) target = $region52
    $region51: #{resnet50_head_forward.1} parent=5 // pred_region
      %s3031 = ssub.s32 %s12, 2
      // Predicated region
      $region53: #{resnet50_head_forward.1} parent=51 // pred_check
        %p3032 = pneg %p172
      $region54: #{resnet50_head_forward.1} parent=51 // pred_check_branch
        %3034 = sbr.rel (%p3032) target = $region56
      $region55: #{resnet50_head_forward.1} parent=51 // pred_region
        %s3035 = smul.u32 32, %s18
        %p3036 = scmp.lt.s32.totalorder %s3035, 63
        %s3037 = scalar_select %p3036, %s3035, 63
        %s3038 = smul.addr %s3037, 8
        %s3039 = scalar_lea.vmem %s6, %s3038
      $region56: #{resnet50_head_forward.1} parent=51 // pred_fallthru
        _
    $region52: #{resnet50_head_forward.1} parent=5 // pred_fallthru
      _
  $region6: #{resnet50_head_forward.1} parent=0 // loop_footer
    %s16 = sadd.s32 1, %s12
  $region7: #{resnet50_head_forward.1} parent=0 // loop_footer_branch
    %11 = sbr.rel target = $region3
  $region8: #{resnet50_head_forward.1} parent=0 // loop_exit
    _

</llo_original>
